<compile_context>
chip_gen: v5e
topology: v5e:2x2
jax: 0.10.0
libtpu: 0.0.40
codegen_flags: <defaults>
</compile_context>

<pallas_src>
import jax
import jax.numpy as jnp
import numpy as np
from jax.experimental import pallas as pl
from jax.experimental.pallas import tpu as pltpu


def _sims_kernel(img_ref, capT_ref, pool_ref, out_ref):
    ti, tc = out_ref.shape
    r = img_ref.shape[0] // ti

    # coding: bf16 x bf16 MXU matmul with f32 accumulation.  The region-validity
    # mask is already folded into the K dimension (0 / -1e30 column in img rows,
    # matching 1.0 row in capT), so `s` arrives pre-biased.
    s = jnp.dot(img_ref[...], capT_ref[...], preferred_element_type=jnp.float32)

    # pooling (1): max over image regions (kept in f32 so the -1e30 bias behaves).
    s_max = jnp.max(s.reshape(ti, r, -1), axis=1)                  # (ti, tc*L)

    # pooling (2): masked mean over caption words via the per-tile block-diagonal
    # pooling matrix (word mask and 1/max(len,1) folded in), second bf16 matmul.
    out_ref[...] = jnp.dot(s_max.astype(jnp.bfloat16), pool_ref[...],
                           preferred_element_type=jnp.float32)


def sims_encoder(img_emb, cap_emb, img_lens, cap_lens, *,
                 tile_i=None, tile_c=None, vmem_budget_bytes=40 << 20):
    n_img, R, D = img_emb.shape
    n_cap, L, Dc = cap_emb.shape
    assert D == Dc

    # Pad K to a lane multiple; one padded column (index D) carries the region bias.
    d_pad = pl.cdiv(D + 1, 128) * 128

    # ---- grid-invariant precompute, hoisted out of the kernel ----------------
    img = img_emb.astype(jnp.float32)
    img = img * jax.lax.rsqrt(jnp.sum(img * img, -1, keepdims=True) + 1e-8)
    cap = cap_emb.astype(jnp.float32)
    cap = cap * jax.lax.rsqrt(jnp.sum(cap * cap, -1, keepdims=True) + 1e-8)

    il = img_lens.astype(jnp.int32)
    cl = cap_lens.astype(jnp.int32)
    # additive region mask, folded into the matmul K dimension below (f32 -> bf16;
    # |s| <= 1 so -1e30 dominates any valid similarity).
    bias = jnp.where(jnp.arange(R)[None, :] < il[:, None], 0.0, -1e30)   # (n_img, R)

    # ---- tile selection -------------------------------------------------------
    # caption tile (output lane dim): multiple of 128; keep captions fully resident
    # (single tile -> each caption byte loaded exactly once) when they fit.
    if tile_c is None:
        tc = 128
        n_cap_128 = pl.cdiv(n_cap, 128) * 128
        if n_cap_128 <= 512:
            fixed = 2 * (d_pad * n_cap_128 * L * 2) + 2 * (n_cap_128 * L * n_cap_128 * 2)
            if fixed <= vmem_budget_bytes // 2:
                tc = n_cap_128
    else:
        tc = int(tile_c)
    assert tc % 128 == 0
    n_cap_p = pl.cdiv(n_cap, tc) * tc

    # image tile: grow tile_i (multiples of 8) toward tile_i*R ~ 1024 (MXU M fill,
    # DMA roofline) under the VMEM estimate; never pad far beyond n_img.
    if tile_i is None:
        fixed = 2 * (d_pad * tc * L * 2) + 2 * (tc * L * tc * 2)     # capT + pool, x2 buf
        ti_cap = max(8, pl.cdiv(n_img, 8) * 8)
        ti = 8
        while True:
            nxt = ti + 8
            if nxt > ti_cap or nxt * R > 1024:
                break
            need = (fixed
                    + 2 * (nxt * R * d_pad * 2)                      # img tile (bf16, x2 buf)
                    + 2 * (nxt * tc * 4)                             # out tile  (f32,  x2 buf)
                    + nxt * R * tc * L * 4                           # s  intermediate (f32)
                    + nxt * tc * L * 4)                              # s_max intermediate
            if need > vmem_budget_bytes:
                break
            ti = nxt
    else:
        ti = int(tile_i)
    assert ti % 8 == 0 and (ti * R) % 8 == 0
    n_img_p = pl.cdiv(n_img, ti) * ti

    # ---- build padded, pre-laid-out operands ---------------------------------
    # image operand: (n_img_p*R, d_pad) bf16; column D holds the 0/-1e30 region bias.
    img_flat = jnp.zeros((n_img_p, R, d_pad), jnp.float32)
    img_flat = img_flat.at[:n_img, :, :D].set(img)
    img_flat = img_flat.at[:n_img, :, D].set(bias)
    img_flat = img_flat.reshape(n_img_p * R, d_pad).astype(jnp.bfloat16)

    # caption operand: (d_pad, n_cap_p*L) bf16; row D = 1.0 carries the bias column.
    capT = jnp.zeros((d_pad, n_cap_p, L), jnp.float32)
    capT = capT.at[:D, :n_cap, :].set(jnp.transpose(cap, (2, 0, 1)))
    capT = capT.at[D, :, :].set(1.0)
    capT = capT.reshape(d_pad, n_cap_p * L).astype(jnp.bfloat16)

    # compact per-tile block-diagonal word-pooling blocks: (n_cap_tiles, tc*L, tc) bf16.
    w = (jnp.arange(L)[None, :] < cl[:, None]).astype(jnp.float32)       # (n_cap, L)
    w = w / jnp.maximum(cl, 1).astype(jnp.float32)[:, None]
    w = jnp.pad(w, ((0, n_cap_p - n_cap), (0, 0)))                        # (n_cap_p, L)
    eye = jnp.eye(tc, dtype=jnp.float32)
    pool = (w.reshape(n_cap_p // tc, tc, L)[:, :, :, None]
            * eye[None, :, None, :]).reshape(n_cap_p // tc, tc * L, tc)
    pool = pool.astype(jnp.bfloat16)

    # ---- grid order: larger operand on the OUTER axis (streamed from HBM once) ----
    n_i_t = n_img_p // ti
    n_c_t = n_cap_p // tc
    img_bytes = img_flat.size * 2
    cap_bytes = capT.size * 2 + pool.size * 2
    images_outer = img_bytes >= cap_bytes
    if images_outer:
        grid = (n_i_t, n_c_t)
        i_of = lambda a, b: a
        j_of = lambda a, b: b
    else:
        grid = (n_c_t, n_i_t)
        i_of = lambda a, b: b
        j_of = lambda a, b: a

    in_specs = [
        pl.BlockSpec((ti * R, d_pad), lambda a, b: (i_of(a, b), 0)),          # image tile
        pl.BlockSpec((d_pad, tc * L), lambda a, b: (0, j_of(a, b))),          # caption tile
        pl.BlockSpec((pl.Squeezed(), tc * L, tc),
                     lambda a, b: (j_of(a, b), 0, 0)),                        # pooling block
    ]
    out_spec = pl.BlockSpec((ti, tc), lambda a, b: (i_of(a, b), j_of(a, b)))  # lane-dense sims

    out = pl.pallas_call(
        _sims_kernel,
        out_shape=jax.ShapeDtypeStruct((n_img_p, n_cap_p), jnp.float32),
        grid_spec=pltpu.PrefetchScalarGridSpec(
            num_scalar_prefetch=0,
            grid=grid,
            in_specs=in_specs,
            out_specs=out_spec,
        ),
        compiler_params=pltpu.CompilerParams(
            dimension_semantics=("parallel", "parallel"),
            vmem_limit_bytes=48 << 20),
    )(img_flat, capT, pool)
    return out[:n_img, :n_cap]


def sims_reference(img_emb, cap_emb, img_lens, cap_lens):
    """Pure-JAX (f32) reference of the same coding + pooling."""
    n_img, R, _ = img_emb.shape
    n_cap, L, _ = cap_emb.shape
    img = img_emb * jax.lax.rsqrt(jnp.sum(img_emb ** 2, -1, keepdims=True) + 1e-8)
    cap = cap_emb * jax.lax.rsqrt(jnp.sum(cap_emb ** 2, -1, keepdims=True) + 1e-8)
    s = jnp.einsum("ird,cwd->icrw", img, cap)                    # (n_img, n_cap, R, L)
    r_mask = jnp.arange(R)[None, None, :, None] < img_lens[:, None, None, None]
    s = jnp.where(r_mask, s, -1e30)
    s_max = jnp.max(s, axis=2)                                   # (n_img, n_cap, L)
    w_mask = jnp.arange(L)[None, None, :] < cap_lens[None, :, None]
    s_sum = jnp.sum(jnp.where(w_mask, s_max, 0.0), axis=-1)      # (n_img, n_cap)
    return s_sum / jnp.maximum(cap_lens, 1)[None, :].astype(jnp.float32)


if __name__ == "__main__":
    key = jax.random.PRNGKey(0)
    k1, k2, k3, k4, k5 = jax.random.split(key, 5)

    n_img, n_regions, D = 2, 16, 32
    n_cap, n_words = 4, 8

    img_emb = jax.random.normal(k1, (n_img, n_regions, D), dtype=jnp.float32)
    cap_emb = jax.random.normal(k2, (n_cap, n_words, D), dtype=jnp.float32)
    img_lens = jnp.array([16, 12], dtype=jnp.int32)
    cap_lens = jnp.array([8, 5, 7, 3], dtype=jnp.int32)

    sims = jax.block_until_ready(sims_encoder(img_emb, cap_emb, img_lens, cap_lens))
    ref = sims_reference(img_emb, cap_emb, img_lens, cap_lens)
    # bf16 MXU operands (f32 accumulation) -> loosen tolerance vs the f32 reference.
    np.testing.assert_allclose(np.asarray(sims), np.asarray(ref), rtol=1e-2, atol=1e-2)

    # Config 2: multiple image tiles worth of images + image-axis padding.
    n_img2 = 20
    img_emb2 = jax.random.normal(k3, (n_img2, n_regions, D), dtype=jnp.float32)
    img_lens2 = jnp.array([n_regions] * 10 + [7] * 10, dtype=jnp.int32)
    sims2 = jax.block_until_ready(sims_encoder(img_emb2, cap_emb, img_lens2, cap_lens))
    ref2 = sims_reference(img_emb2, cap_emb, img_lens2, cap_lens)
    np.testing.assert_allclose(np.asarray(sims2), np.asarray(ref2), rtol=1e-2, atol=1e-2)

    # Config 3: multiple caption tiles (forced tile_c=128) -> exercises the compact
    # per-tile pooling blocks and the caption-outer grid order.
    n_cap3 = 160
    cap_emb3 = jax.random.normal(k4, (n_cap3, n_words, D), dtype=jnp.float32)
    cap_lens3 = jax.random.randint(k5, (n_cap3,), 1, n_words + 1).astype(jnp.int32)
    sims3 = jax.block_until_ready(
        sims_encoder(img_emb, cap_emb3, img_lens, cap_lens3, tile_c=128))
    ref3 = sims_reference(img_emb, cap_emb3, img_lens, cap_lens3)
    np.testing.assert_allclose(np.asarray(sims3), np.asarray(ref3), rtol=1e-2, atol=1e-2)

    print("KERNEL_OK")
</pallas_src>

<mosaic_0001>
module attributes {stable_mosaic.version = 11 : i64} {
  func.func @_sims_kernel(%arg0: i32, %arg1: i32, %arg2: memref<128x128xbf16, #tpu.memory_space<vmem>>, %arg3: memref<128x1024xbf16, #tpu.memory_space<vmem>>, %arg4: memref<1x1024x128xbf16, #tpu.memory_space<vmem>>, %arg5: memref<8x128xf32, #tpu.memory_space<vmem>>) attributes {dimension_semantics = [#tpu.dimension_semantics<parallel>, #tpu.dimension_semantics<parallel>], iteration_bounds = array<i64: 1, 1>, scalar_prefetch = 0 : i64, scratch_operands = 0 : i64, tpu.core_type = #tpu.core_type<tc>, window_params = [{transform_indices = @transform_0, window_bounds = array<i64: 128, 128>}, {transform_indices = @transform_1, window_bounds = array<i64: 128, 1024>}, {transform_indices = @transform_2, window_bounds = array<i64: 1, 1024, 128>}, {transform_indices = @transform_3, window_bounds = array<i64: 8, 128>}]} {
    %c0 = arith.constant 0 : index
    %c0_0 = arith.constant 0 : index
    %0 = vector.load %arg2[%c0, %c0_0] : memref<128x128xbf16, #tpu.memory_space<vmem>>, vector<128x128xbf16>
    %c0_1 = arith.constant 0 : index
    %c0_2 = arith.constant 0 : index
    %1 = vector.load %arg3[%c0_1, %c0_2] : memref<128x1024xbf16, #tpu.memory_space<vmem>>, vector<128x1024xbf16>
    %cst = arith.constant dense<0.000000e+00> : vector<128x1024xf32>
    %2 = tpu.matmul %0, %1, %cst {dimension_numbers = #tpu.dot_dimension_numbers<[1], [0], [0], [1], [0, 0, 1, 1], [], []>} : vector<128x128xbf16>, vector<128x1024xbf16>, vector<128x1024xf32> -> vector<128x1024xf32>
    %3 = vector.shape_cast %2 : vector<128x1024xf32> to vector<8x16x1024xf32>
    %cst_3 = arith.constant dense<0xFF800000> : vector<8x1024xf32>
    %4 = vector.multi_reduction <maximumf>, %3, %cst_3 [1] : vector<8x16x1024xf32> to vector<8x1024xf32>
    %5 = arith.truncf %4 : vector<8x1024xf32> to vector<8x1024xbf16>
    %c0_4 = arith.constant 0 : index
    %c0_5 = arith.constant 0 : index
    %c0_6 = arith.constant 0 : index
    %6 = vector.load %arg4[%c0_4, %c0_5, %c0_6] : memref<1x1024x128xbf16, #tpu.memory_space<vmem>>, vector<1x1024x128xbf16>
    %7 = vector.shape_cast %6 : vector<1x1024x128xbf16> to vector<1024x128xbf16>
    %cst_7 = arith.constant dense<0.000000e+00> : vector<8x128xf32>
    %8 = tpu.matmul %5, %7, %cst_7 {dimension_numbers = #tpu.dot_dimension_numbers<[1], [0], [0], [1], [0, 0, 1, 1], [], []>} : vector<8x1024xbf16>, vector<1024x128xbf16>, vector<8x128xf32> -> vector<8x128xf32>
    %c0_8 = arith.constant 0 : index
    %c0_9 = arith.constant 0 : index
    %9 = vector.load %arg5[%c0_8, %c0_9] : memref<8x128xf32, #tpu.memory_space<vmem>>, vector<8x128xf32>
    tpu.vector_store %arg5[%c0_8, %c0_9], %8 {strides = array<i32>} : memref<8x128xf32, #tpu.memory_space<vmem>>, vector<8x128xf32>,
    return
  }
  func.func @transform_0(%arg0: i32, %arg1: i32) -> (i32, i32) {
    %c0_i32 = arith.constant 0 : i32
    %c0_i32_0 = arith.constant 0 : i32
    return %arg1, %c0_i32 : i32, i32
  }
  func.func @transform_1(%arg0: i32, %arg1: i32) -> (i32, i32) {
    %c0_i32 = arith.constant 0 : i32
    %c0_i32_0 = arith.constant 0 : i32
    return %c0_i32, %arg0 : i32, i32
  }
  func.func @transform_2(%arg0: i32, %arg1: i32) -> (i32, i32, i32) {
    %c0_i32 = arith.constant 0 : i32
    %c0_i32_0 = arith.constant 0 : i32
    %c0_i32_1 = arith.constant 0 : i32
    return %arg0, %c0_i32, %c0_i32_0 : i32, i32, i32
  }
  func.func @transform_3(%arg0: i32, %arg1: i32) -> (i32, i32) {
    %c0_i32 = arith.constant 0 : i32
    return %arg1, %arg0 : i32, i32
  }
}

</mosaic_0001>

<llo_original>
// kernel: tpu_custom_call.1
$region0: #{tpu_custom_call.1}
  #allocation0 [shape = 'u32[]', space=smem, size = 0x4, offset = 0x4, fixed_abs, tag = 'smem constant byte address 0x4 - core index']
  #allocation1 [shape = 'u32[72,128]{1,0:T(1,128)}', space=vmem, size = 0x9000, scoped, tag = 'internal scratch']
  %s0 = inlined_call_operand.hbm [shape: bf16[128,128], index: 0, kind: input, shape index: {}]
  %s1 = inlined_call_operand.hbm [shape: bf16[128,1024], index: 1, kind: input, shape index: {}]
  %s2 = inlined_call_operand.hbm [shape: bf16[1,1024,128], index: 2, kind: input, shape index: {}]
  %s3 = inlined_call_operand.hbm [shape: f32[8,128], index: 3, kind: output, shape index: {}]
  %s4 = sld [smem:[#allocation0]]
  $region34: #{tpu_custom_call.1} parent=0
    _
  %s6 = ssub.s32 1, %s4
  %s7 = scalar_select 0, %s6, %s4
  $region1: #{tpu_custom_call.1} parent=0
    #allocation2 [shape = 'u8[32768]{0}', space=vmem, size = 0x8000, scoped, tag = 'input window, operand 0, single buffered']
    #allocation3 [shape = 's32[1]{0}', space=sflag, size = 0x4, scoped, tag = 'scoped memory for tpu_custom_call.1']
    #allocation4 [shape = 's32[1]{0}', space=sflag, size = 0x4, scoped, tag = 'scoped memory for tpu_custom_call.1']
    #allocation5 [shape = 'u8[262144]{0}', space=vmem, size = 0x40000, scoped, tag = 'input window, operand 1, single buffered']
    #allocation6 [shape = 's32[1]{0}', space=sflag, size = 0x4, scoped, tag = 'scoped memory for tpu_custom_call.1']
    #allocation7 [shape = 'u8[262144]{0}', space=vmem, size = 0x40000, scoped, tag = 'input window, operand 2, single buffered']
    #allocation8 [shape = 'u8[4096]{0}', space=vmem, size = 0x1000, scoped, tag = 'output window, operand 0, single buffered']
    %8 = vsyncpa [#allocation3], 0
    %9 = vsyncpa [#allocation6], 0
    %10 = vsyncpa [#allocation4], 0
    // Predicated region
    $region2: #{tpu_custom_call.1} parent=1 // pred_check
      _
    $region3: #{tpu_custom_call.1} parent=1 // pred_check_branch
      %12 = sbr.rel (0) target = $region5
    $region4: #{tpu_custom_call.1} parent=1 // pred_region
      %14 = vsyncadd [#allocation3], 0
      %s15 = sshll.u32 %s0, 4
      %s16 = int_to_ptr.hbm [resolvable:$true] %s15
      %s17 = sshll.u32 [#allocation2], 4
      %s18 = int_to_ptr.vmem [resolvable:$true] %s17
      %23 = dma.hbm_to_vmem [thread:$0]  %s16, 1024, %s18, [#allocation3], 64, 64, 4
    $region5: #{tpu_custom_call.1} parent=1 // pred_fallthru
      _
    // Predicated region
    $region6: #{tpu_custom_call.1} parent=1 // pred_check
      _
    $region7: #{tpu_custom_call.1} parent=1 // pred_check_branch
      %25 = sbr.rel (0) target = $region9
    $region8: #{tpu_custom_call.1} parent=1 // pred_region
      %27 = vsyncadd [#allocation6], 0
      %s28 = sshll.u32 %s1, 4
      %s29 = int_to_ptr.hbm [resolvable:$true] %s28
      %s30 = sshll.u32 [#allocation5], 4
      %s31 = int_to_ptr.vmem [resolvable:$true] %s30
      %36 = dma.hbm_to_vmem [thread:$0]  %s29, 8192, %s31, [#allocation6], 512, 512, 32
    $region9: #{tpu_custom_call.1} parent=1 // pred_fallthru
      _
    // Predicated region
    $region10: #{tpu_custom_call.1} parent=1 // pred_check
      _
    $region11: #{tpu_custom_call.1} parent=1 // pred_check_branch
      %38 = sbr.rel (0) target = $region13
    $region12: #{tpu_custom_call.1} parent=1 // pred_region
      %40 = vsyncadd [#allocation6], 0
      %s41 = sshll.u32 %s2, 4
      %s42 = int_to_ptr.hbm [resolvable:$true] %s41
      %s43 = sshll.u32 [#allocation7], 4
      %s44 = int_to_ptr.vmem [resolvable:$true] %s43
      %49 = dma.hbm_to_vmem [thread:$0]  %s42, 8192, %s44, [#allocation6], 64, 64, 4
    $region13: #{tpu_custom_call.1} parent=1 // pred_fallthru
      _
    // Predicated region
    $region14: #{tpu_custom_call.1} parent=1 // pred_check
      _
    $region15: #{tpu_custom_call.1} parent=1 // pred_check_branch
      %51 = sbr.rel (0) target = $region17
    $region16: #{tpu_custom_call.1} parent=1 // pred_region
      %53 = dma.done [#allocation3], 1024
    $region17: #{tpu_custom_call.1} parent=1 // pred_fallthru
      _
    // Predicated region
    $region18: #{tpu_custom_call.1} parent=1 // pred_check
      _
    $region19: #{tpu_custom_call.1} parent=1 // pred_check_branch
      %55 = sbr.rel (0) target = $region21
    $region20: #{tpu_custom_call.1} parent=1 // pred_region
      %57 = dma.done [#allocation6], 8192
    $region21: #{tpu_custom_call.1} parent=1 // pred_fallthru
      _
    // Predicated region
    $region22: #{tpu_custom_call.1} parent=1 // pred_check
      _
    $region23: #{tpu_custom_call.1} parent=1 // pred_check_branch
      %59 = sbr.rel (0) target = $region25
    $region24: #{tpu_custom_call.1} parent=1 // pred_region
      %61 = dma.done [#allocation6], 8192
    $region25: #{tpu_custom_call.1} parent=1 // pred_fallthru
      _
    %v62 = vld [vmem:[#allocation2] sm:$0xf]
    %v63 = vld [vmem:[#allocation2 + $0x4] sm:$0xf]
    %v64 = vld [vmem:[#allocation2 + $0x8] sm:$0xf]
    %v65 = vld [vmem:[#allocation2 + $0xc] sm:$0xf]
    %v66 = vld [vmem:[#allocation2 + $0x10] sm:$0xf]
    %v67 = vld [vmem:[#allocation2 + $0x14] sm:$0xf]
    %v68 = vld [vmem:[#allocation2 + $0x18] sm:$0xf]
    %v69 = vld [vmem:[#allocation2 + $0x1c] sm:$0xf]
    %v70 = vld [vmem:[#allocation2 + $0x20] sm:$0xf]
    %v71 = vld [vmem:[#allocation2 + $0x24] sm:$0xf]
    %v72 = vld [vmem:[#allocation2 + $0x28] sm:$0xf]
    %v73 = vld [vmem:[#allocation2 + $0x2c] sm:$0xf]
    %v74 = vld [vmem:[#allocation2 + $0x30] sm:$0xf]
    %v75 = vld [vmem:[#allocation2 + $0x34] sm:$0xf]
    %v76 = vld [vmem:[#allocation2 + $0x38] sm:$0xf]
    %v77 = vld [vmem:[#allocation2 + $0x3c] sm:$0xf]
    %v78 = vld [vmem:[#allocation5] sm:$0xff]
    %v79 = vld [vmem:[#allocation5 + $0x8] sm:$0xff]
    %v80 = vld [vmem:[#allocation5 + $0x10] sm:$0xff]
    %v81 = vld [vmem:[#allocation5 + $0x18] sm:$0xff]
    %v82 = vld [vmem:[#allocation5 + $0x20] sm:$0xff]
    %v83 = vld [vmem:[#allocation5 + $0x28] sm:$0xff]
    %v84 = vld [vmem:[#allocation5 + $0x30] sm:$0xff]
    %v85 = vld [vmem:[#allocation5 + $0x38] sm:$0xff]
    %v86 = vld [vmem:[#allocation5 + $0x40] sm:$0xff]
    %v87 = vld [vmem:[#allocation5 + $0x48] sm:$0xff]
    %v88 = vld [vmem:[#allocation5 + $0x50] sm:$0xff]
    %v89 = vld [vmem:[#allocation5 + $0x58] sm:$0xff]
    %v90 = vld [vmem:[#allocation5 + $0x60] sm:$0xff]
    %v91 = vld [vmem:[#allocation5 + $0x68] sm:$0xff]
    %v92 = vld [vmem:[#allocation5 + $0x70] sm:$0xff]
    %v93 = vld [vmem:[#allocation5 + $0x78] sm:$0xff]
    %v94 = vld [vmem:[#allocation5 + $0x80] sm:$0xff]
    %v95 = vld [vmem:[#allocation5 + $0x88] sm:$0xff]
    %v96 = vld [vmem:[#allocation5 + $0x90] sm:$0xff]
    %v97 = vld [vmem:[#allocation5 + $0x98] sm:$0xff]
    %v98 = vld [vmem:[#allocation5 + $0xa0] sm:$0xff]
    %v99 = vld [vmem:[#allocation5 + $0xa8] sm:$0xff]
    %v100 = vld [vmem:[#allocation5 + $0xb0] sm:$0xff]
    %v101 = vld [vmem:[#allocation5 + $0xb8] sm:$0xff]
    %v102 = vld [vmem:[#allocation5 + $0xc0] sm:$0xff]
    %v103 = vld [vmem:[#allocation5 + $0xc8] sm:$0xff]
    %v104 = vld [vmem:[#allocation5 + $0xd0] sm:$0xff]
    %v105 = vld [vmem:[#allocation5 + $0xd8] sm:$0xff]
    %v106 = vld [vmem:[#allocation5 + $0xe0] sm:$0xff]
    %v107 = vld [vmem:[#allocation5 + $0xe8] sm:$0xff]
    %v108 = vld [vmem:[#allocation5 + $0xf0] sm:$0xff]
    %v109 = vld [vmem:[#allocation5 + $0xf8] sm:$0xff]
    %v110 = vld [vmem:[#allocation5 + $0x100] sm:$0xff]
    %v111 = vld [vmem:[#allocation5 + $0x108] sm:$0xff]
    %v112 = vld [vmem:[#allocation5 + $0x110] sm:$0xff]
    %v113 = vld [vmem:[#allocation5 + $0x118] sm:$0xff]
    %v114 = vld [vmem:[#allocation5 + $0x120] sm:$0xff]
    %v115 = vld [vmem:[#allocation5 + $0x128] sm:$0xff]
    %v116 = vld [vmem:[#allocation5 + $0x130] sm:$0xff]
    %v117 = vld [vmem:[#allocation5 + $0x138] sm:$0xff]
    %v118 = vld [vmem:[#allocation5 + $0x140] sm:$0xff]
    %v119 = vld [vmem:[#allocation5 + $0x148] sm:$0xff]
    %v120 = vld [vmem:[#allocation5 + $0x150] sm:$0xff]
    %v121 = vld [vmem:[#allocation5 + $0x158] sm:$0xff]
    %v122 = vld [vmem:[#allocation5 + $0x160] sm:$0xff]
    %v123 = vld [vmem:[#allocation5 + $0x168] sm:$0xff]
    %v124 = vld [vmem:[#allocation5 + $0x170] sm:$0xff]
    %v125 = vld [vmem:[#allocation5 + $0x178] sm:$0xff]
    %v126 = vld [vmem:[#allocation5 + $0x180] sm:$0xff]
    %v127 = vld [vmem:[#allocation5 + $0x188] sm:$0xff]
    %v128 = vld [vmem:[#allocation5 + $0x190] sm:$0xff]
    %v129 = vld [vmem:[#allocation5 + $0x198] sm:$0xff]
    %v130 = vld [vmem:[#allocation5 + $0x1a0] sm:$0xff]
    %v131 = vld [vmem:[#allocation5 + $0x1a8] sm:$0xff]
    %v132 = vld [vmem:[#allocation5 + $0x1b0] sm:$0xff]
    %v133 = vld [vmem:[#allocation5 + $0x1b8] sm:$0xff]
    %v134 = vld [vmem:[#allocation5 + $0x1c0] sm:$0xff]
    %v135 = vld [vmem:[#allocation5 + $0x1c8] sm:$0xff]
    %v136 = vld [vmem:[#allocation5 + $0x1d0] sm:$0xff]
    %v137 = vld [vmem:[#allocation5 + $0x1d8] sm:$0xff]
    %v138 = vld [vmem:[#allocation5 + $0x1e0] sm:$0xff]
    %v139 = vld [vmem:[#allocation5 + $0x1e8] sm:$0xff]
    %v140 = vld [vmem:[#allocation5 + $0x1f0] sm:$0xff]
    %v141 = vld [vmem:[#allocation5 + $0x1f8] sm:$0xff]
    %v158 = vunpack.c.l.b16 %v62
    %v159 = vunpack.c.l.b16 %v63
    %v160 = vunpack.c.l.b16 %v64
    %v161 = vunpack.c.l.b16 %v65
    %v162 = vunpack.c.l.b16 %v66
    %v163 = vunpack.c.l.b16 %v67
    %v164 = vunpack.c.l.b16 %v68
    %v165 = vunpack.c.l.b16 %v69
    %v166 = vunpack.c.l.b16 %v70
    %v167 = vunpack.c.l.b16 %v71
    %v168 = vunpack.c.l.b16 %v72
    %v169 = vunpack.c.l.b16 %v73
    %v170 = vunpack.c.l.b16 %v74
    %v171 = vunpack.c.l.b16 %v75
    %v172 = vunpack.c.l.b16 %v76
    %v173 = vunpack.c.l.b16 %v77
    %v174 = vpack.c.b16 %v159, %v158
    %v175 = vpack.c.b16 %v161, %v160
    %v176 = vpack.c.b16 %v163, %v162
    %v177 = vpack.c.b16 %v165, %v164
    %v178 = vpack.c.b16 %v167, %v166
    %v179 = vpack.c.b16 %v169, %v168
    %v180 = vpack.c.b16 %v171, %v170
    %v181 = vpack.c.b16 %v173, %v172
    %v254 = vunpack.c.l.b16 %v78
    %v255 = vunpack.c.h.b16 %v78
    %v256 = vunpack.c.l.b16 %v79
    %v257 = vunpack.c.h.b16 %v79
    %v258 = vunpack.c.l.b16 %v80
    %v259 = vunpack.c.h.b16 %v80
    %v260 = vunpack.c.l.b16 %v81
    %v261 = vunpack.c.h.b16 %v81
    %v262 = vunpack.c.l.b16 %v82
    %v263 = vunpack.c.h.b16 %v82
    %v264 = vunpack.c.l.b16 %v83
    %v265 = vunpack.c.h.b16 %v83
    %v266 = vunpack.c.l.b16 %v84
    %v267 = vunpack.c.h.b16 %v84
    %v268 = vunpack.c.l.b16 %v85
    %v269 = vunpack.c.h.b16 %v85
    %v270 = vunpack.c.l.b16 %v86
    %v271 = vunpack.c.h.b16 %v86
    %v272 = vunpack.c.l.b16 %v87
    %v273 = vunpack.c.h.b16 %v87
    %v274 = vunpack.c.l.b16 %v88
    %v275 = vunpack.c.h.b16 %v88
    %v276 = vunpack.c.l.b16 %v89
    %v277 = vunpack.c.h.b16 %v89
    %v278 = vunpack.c.l.b16 %v90
    %v279 = vunpack.c.h.b16 %v90
    %v280 = vunpack.c.l.b16 %v91
    %v281 = vunpack.c.h.b16 %v91
    %v282 = vunpack.c.l.b16 %v92
    %v283 = vunpack.c.h.b16 %v92
    %v284 = vunpack.c.l.b16 %v93
    %v285 = vunpack.c.h.b16 %v93
    %v286 = vunpack.c.l.b16 %v94
    %v287 = vunpack.c.h.b16 %v94
    %v288 = vunpack.c.l.b16 %v95
    %v289 = vunpack.c.h.b16 %v95
    %v290 = vunpack.c.l.b16 %v96
    %v291 = vunpack.c.h.b16 %v96
    %v292 = vunpack.c.l.b16 %v97
    %v293 = vunpack.c.h.b16 %v97
    %v294 = vunpack.c.l.b16 %v98
    %v295 = vunpack.c.h.b16 %v98
    %v296 = vunpack.c.l.b16 %v99
    %v297 = vunpack.c.h.b16 %v99
    %v298 = vunpack.c.l.b16 %v100
    %v299 = vunpack.c.h.b16 %v100
    %v300 = vunpack.c.l.b16 %v101
    %v301 = vunpack.c.h.b16 %v101
    %v302 = vunpack.c.l.b16 %v102
    %v303 = vunpack.c.h.b16 %v102
    %v304 = vunpack.c.l.b16 %v103
    %v305 = vunpack.c.h.b16 %v103
    %v306 = vunpack.c.l.b16 %v104
    %v307 = vunpack.c.h.b16 %v104
    %v308 = vunpack.c.l.b16 %v105
    %v309 = vunpack.c.h.b16 %v105
    %v310 = vunpack.c.l.b16 %v106
    %v311 = vunpack.c.h.b16 %v106
    %v312 = vunpack.c.l.b16 %v107
    %v313 = vunpack.c.h.b16 %v107
    %v314 = vunpack.c.l.b16 %v108
    %v315 = vunpack.c.h.b16 %v108
    %v316 = vunpack.c.l.b16 %v109
    %v317 = vunpack.c.h.b16 %v109
    %v318 = vunpack.c.l.b16 %v110
    %v319 = vunpack.c.h.b16 %v110
    %v320 = vunpack.c.l.b16 %v111
    %v321 = vunpack.c.h.b16 %v111
    %v322 = vunpack.c.l.b16 %v112
    %v323 = vunpack.c.h.b16 %v112
    %v324 = vunpack.c.l.b16 %v113
    %v325 = vunpack.c.h.b16 %v113
    %v326 = vunpack.c.l.b16 %v114
    %v327 = vunpack.c.h.b16 %v114
    %v328 = vunpack.c.l.b16 %v115
    %v329 = vunpack.c.h.b16 %v115
    %v330 = vunpack.c.l.b16 %v116
    %v331 = vunpack.c.h.b16 %v116
    %v332 = vunpack.c.l.b16 %v117
    %v333 = vunpack.c.h.b16 %v117
    %v334 = vunpack.c.l.b16 %v118
    %v335 = vunpack.c.h.b16 %v118
    %v336 = vunpack.c.l.b16 %v119
    %v337 = vunpack.c.h.b16 %v119
    %v338 = vunpack.c.l.b16 %v120
    %v339 = vunpack.c.h.b16 %v120
    %v340 = vunpack.c.l.b16 %v121
    %v341 = vunpack.c.h.b16 %v121
    %v342 = vunpack.c.l.b16 %v122
    %v343 = vunpack.c.h.b16 %v122
    %v344 = vunpack.c.l.b16 %v123
    %v345 = vunpack.c.h.b16 %v123
    %v346 = vunpack.c.l.b16 %v124
    %v347 = vunpack.c.h.b16 %v124
    %v348 = vunpack.c.l.b16 %v125
    %v349 = vunpack.c.h.b16 %v125
    %v350 = vunpack.c.l.b16 %v126
    %v351 = vunpack.c.h.b16 %v126
    %v352 = vunpack.c.l.b16 %v127
    %v353 = vunpack.c.h.b16 %v127
    %v354 = vunpack.c.l.b16 %v128
    %v355 = vunpack.c.h.b16 %v128
    %v356 = vunpack.c.l.b16 %v129
    %v357 = vunpack.c.h.b16 %v129
    %v358 = vunpack.c.l.b16 %v130
    %v359 = vunpack.c.h.b16 %v130
    %v360 = vunpack.c.l.b16 %v131
    %v361 = vunpack.c.h.b16 %v131
    %v362 = vunpack.c.l.b16 %v132
    %v363 = vunpack.c.h.b16 %v132
    %v364 = vunpack.c.l.b16 %v133
    %v365 = vunpack.c.h.b16 %v133
    %v366 = vunpack.c.l.b16 %v134
    %v367 = vunpack.c.h.b16 %v134
    %v368 = vunpack.c.l.b16 %v135
    %v369 = vunpack.c.h.b16 %v135
    %v370 = vunpack.c.l.b16 %v136
    %v371 = vunpack.c.h.b16 %v136
    %v372 = vunpack.c.l.b16 %v137
    %v373 = vunpack.c.h.b16 %v137
    %v374 = vunpack.c.l.b16 %v138
    %v375 = vunpack.c.h.b16 %v138
    %v376 = vunpack.c.l.b16 %v139
    %v377 = vunpack.c.h.b16 %v139
    %v378 = vunpack.c.l.b16 %v140
    %v379 = vunpack.c.h.b16 %v140
    %v380 = vunpack.c.l.b16 %v141
    %v381 = vunpack.c.h.b16 %v141
    %v382 = vpack.c.b16 %v262, %v254
    %v383 = vpack.c.b16 %v263, %v255
    %v384 = vpack.c.b16 %v264, %v256
    %v385 = vpack.c.b16 %v265, %v257
    %v386 = vpack.c.b16 %v266, %v258
    %v387 = vpack.c.b16 %v267, %v259
    %v388 = vpack.c.b16 %v268, %v260
    %v389 = vpack.c.b16 %v269, %v261
    %v390 = vpack.c.b16 %v278, %v270
    %v391 = vpack.c.b16 %v279, %v271
    %v392 = vpack.c.b16 %v280, %v272
    %v393 = vpack.c.b16 %v281, %v273
    %v394 = vpack.c.b16 %v282, %v274
    %v395 = vpack.c.b16 %v283, %v275
    %v396 = vpack.c.b16 %v284, %v276
    %v397 = vpack.c.b16 %v285, %v277
    %v398 = vpack.c.b16 %v294, %v286
    %v399 = vpack.c.b16 %v295, %v287
    %v400 = vpack.c.b16 %v296, %v288
    %v401 = vpack.c.b16 %v297, %v289
    %v402 = vpack.c.b16 %v298, %v290
    %v403 = vpack.c.b16 %v299, %v291
    %v404 = vpack.c.b16 %v300, %v292
    %v405 = vpack.c.b16 %v301, %v293
    %v406 = vpack.c.b16 %v310, %v302
    %v407 = vpack.c.b16 %v311, %v303
    %v408 = vpack.c.b16 %v312, %v304
    %v409 = vpack.c.b16 %v313, %v305
    %v410 = vpack.c.b16 %v314, %v306
    %v411 = vpack.c.b16 %v315, %v307
    %v412 = vpack.c.b16 %v316, %v308
    %v413 = vpack.c.b16 %v317, %v309
    %v414 = vpack.c.b16 %v326, %v318
    %v415 = vpack.c.b16 %v327, %v319
    %v416 = vpack.c.b16 %v328, %v320
    %v417 = vpack.c.b16 %v329, %v321
    %v418 = vpack.c.b16 %v330, %v322
    %v419 = vpack.c.b16 %v331, %v323
    %v420 = vpack.c.b16 %v332, %v324
    %v421 = vpack.c.b16 %v333, %v325
    %v422 = vpack.c.b16 %v342, %v334
    %v423 = vpack.c.b16 %v343, %v335
    %v424 = vpack.c.b16 %v344, %v336
    %v425 = vpack.c.b16 %v345, %v337
    %v426 = vpack.c.b16 %v346, %v338
    %v427 = vpack.c.b16 %v347, %v339
    %v428 = vpack.c.b16 %v348, %v340
    %v429 = vpack.c.b16 %v349, %v341
    %v430 = vpack.c.b16 %v358, %v350
    %v431 = vpack.c.b16 %v359, %v351
    %v432 = vpack.c.b16 %v360, %v352
    %v433 = vpack.c.b16 %v361, %v353
    %v434 = vpack.c.b16 %v362, %v354
    %v435 = vpack.c.b16 %v363, %v355
    %v436 = vpack.c.b16 %v364, %v356
    %v437 = vpack.c.b16 %v365, %v357
    %v438 = vpack.c.b16 %v374, %v366
    %v439 = vpack.c.b16 %v375, %v367
    %v440 = vpack.c.b16 %v376, %v368
    %v441 = vpack.c.b16 %v377, %v369
    %v442 = vpack.c.b16 %v378, %v370
    %v443 = vpack.c.b16 %v379, %v371
    %v444 = vpack.c.b16 %v380, %v372
    %v445 = vpack.c.b16 %v381, %v373
    %510 = vmatpush.bf16.msra.mxu0 %v438
    %511 = vmatpush.bf16.msra.mxu0 %v430
    %512 = vmatpush.bf16.msra.mxu0 %v422
    %513 = vmatpush.bf16.msra.mxu0 %v414
    %514 = vmatpush.bf16.msra.mxu0 %v406
    %515 = vmatpush.bf16.msra.mxu0 %v398
    %516 = vmatpush.bf16.msra.mxu0 %v390
    %517 = vmatpush.bf16.msra.mxu0 %v382
    %518 = vmatmul.bf16.gmra.mxu0 %v174
    %v519 = vpop.f32.mrf.mxu0
    %v520 = vadd.f32 0.0, %v519
    %v521 = vpop.f32.mrf.mxu0
    %v522 = vadd.f32 0.0, %v521
    %523 = vmatmul.bf16.gmra.mxu0 %v175
    %v524 = vpop.f32.mrf.mxu0
    %v525 = vadd.f32 0.0, %v524
    %v526 = vpop.f32.mrf.mxu0
    %v527 = vadd.f32 0.0, %v526
    %528 = vmatmul.bf16.gmra.mxu0 %v176
    %v529 = vpop.f32.mrf.mxu0
    %v530 = vadd.f32 0.0, %v529
    %v531 = vpop.f32.mrf.mxu0
    %v532 = vadd.f32 0.0, %v531
    %533 = vmatmul.bf16.gmra.mxu0 %v177
    %v534 = vpop.f32.mrf.mxu0
    %v535 = vadd.f32 0.0, %v534
    %v536 = vpop.f32.mrf.mxu0
    %v537 = vadd.f32 0.0, %v536
    %538 = vmatmul.bf16.gmra.mxu0 %v178
    %v539 = vpop.f32.mrf.mxu0
    %v540 = vadd.f32 0.0, %v539
    %v541 = vpop.f32.mrf.mxu0
    %v542 = vadd.f32 0.0, %v541
    %543 = vmatmul.bf16.gmra.mxu0 %v179
    %v544 = vpop.f32.mrf.mxu0
    %v545 = vadd.f32 0.0, %v544
    %v546 = vpop.f32.mrf.mxu0
    %v547 = vadd.f32 0.0, %v546
    %548 = vmatmul.bf16.gmra.mxu0 %v180
    %v549 = vpop.f32.mrf.mxu0
    %v550 = vadd.f32 0.0, %v549
    %v551 = vpop.f32.mrf.mxu0
    %v552 = vadd.f32 0.0, %v551
    %553 = vmatmul.bf16.gmra.mxu0 %v181
    %v554 = vpop.f32.mrf.mxu0
    %v555 = vadd.f32 0.0, %v554
    %v556 = vpop.f32.mrf.mxu0
    %v557 = vadd.f32 0.0, %v556
    %558 = vdwg.mxu0
    %559 = vmatpush.bf16.msra.mxu0 %v439
    %560 = vmatpush.bf16.msra.mxu0 %v431
    %561 = vmatpush.bf16.msra.mxu0 %v423
    %562 = vmatpush.bf16.msra.mxu0 %v415
    %563 = vmatpush.bf16.msra.mxu0 %v407
    %564 = vmatpush.bf16.msra.mxu0 %v399
    %565 = vmatpush.bf16.msra.mxu0 %v391
    %566 = vmatpush.bf16.msra.mxu0 %v383
    %567 = vmatmul.bf16.gmra.mxu0 %v174
    %v568 = vpop.f32.mrf.mxu0
    %v569 = vadd.f32 0.0, %v568
    %v570 = vpop.f32.mrf.mxu0
    %v571 = vadd.f32 0.0, %v570
    %572 = vmatmul.bf16.gmra.mxu0 %v175
    %v573 = vpop.f32.mrf.mxu0
    %v574 = vadd.f32 0.0, %v573
    %v575 = vpop.f32.mrf.mxu0
    %v576 = vadd.f32 0.0, %v575
    %577 = vmatmul.bf16.gmra.mxu0 %v176
    %v578 = vpop.f32.mrf.mxu0
    %v579 = vadd.f32 0.0, %v578
    %v580 = vpop.f32.mrf.mxu0
    %v581 = vadd.f32 0.0, %v580
    %582 = vmatmul.bf16.gmra.mxu0 %v177
    %v583 = vpop.f32.mrf.mxu0
    %v584 = vadd.f32 0.0, %v583
    %v585 = vpop.f32.mrf.mxu0
    %v586 = vadd.f32 0.0, %v585
    %587 = vmatmul.bf16.gmra.mxu0 %v178
    %v588 = vpop.f32.mrf.mxu0
    %v589 = vadd.f32 0.0, %v588
    %v590 = vpop.f32.mrf.mxu0
    %v591 = vadd.f32 0.0, %v590
    %592 = vmatmul.bf16.gmra.mxu0 %v179
    %v593 = vpop.f32.mrf.mxu0
    %v594 = vadd.f32 0.0, %v593
    %v595 = vpop.f32.mrf.mxu0
    %v596 = vadd.f32 0.0, %v595
    %597 = vmatmul.bf16.gmra.mxu0 %v180
    %v598 = vpop.f32.mrf.mxu0
    %v599 = vadd.f32 0.0, %v598
    %v600 = vpop.f32.mrf.mxu0
    %v601 = vadd.f32 0.0, %v600
    %602 = vmatmul.bf16.gmra.mxu0 %v181
    %v603 = vpop.f32.mrf.mxu0
    %v604 = vadd.f32 0.0, %v603
    %v605 = vpop.f32.mrf.mxu0
    %v606 = vadd.f32 0.0, %v605
    %607 = vdwg.mxu0
    %608 = vmatpush.bf16.msra.mxu0 %v440
    %609 = vmatpush.bf16.msra.mxu0 %v432
    %610 = vmatpush.bf16.msra.mxu0 %v424
    %611 = vmatpush.bf16.msra.mxu0 %v416
    %612 = vmatpush.bf16.msra.mxu0 %v408
    %613 = vmatpush.bf16.msra.mxu0 %v400
    %614 = vmatpush.bf16.msra.mxu0 %v392
    %615 = vmatpush.bf16.msra.mxu0 %v384
    %616 = vmatmul.bf16.gmra.mxu0 %v174
    %v617 = vpop.f32.mrf.mxu0
    %v618 = vadd.f32 0.0, %v617
    %v619 = vpop.f32.mrf.mxu0
    %v620 = vadd.f32 0.0, %v619
    %621 = vmatmul.bf16.gmra.mxu0 %v175
    %v622 = vpop.f32.mrf.mxu0
    %v623 = vadd.f32 0.0, %v622
    %v624 = vpop.f32.mrf.mxu0
    %v625 = vadd.f32 0.0, %v624
    %626 = vmatmul.bf16.gmra.mxu0 %v176
    %v627 = vpop.f32.mrf.mxu0
    %v628 = vadd.f32 0.0, %v627
    %v629 = vpop.f32.mrf.mxu0
    %v630 = vadd.f32 0.0, %v629
    %631 = vmatmul.bf16.gmra.mxu0 %v177
    %v632 = vpop.f32.mrf.mxu0
    %v633 = vadd.f32 0.0, %v632
    %v634 = vpop.f32.mrf.mxu0
    %v635 = vadd.f32 0.0, %v634
    %636 = vmatmul.bf16.gmra.mxu0 %v178
    %v637 = vpop.f32.mrf.mxu0
    %v638 = vadd.f32 0.0, %v637
    %v639 = vpop.f32.mrf.mxu0
    %v640 = vadd.f32 0.0, %v639
    %641 = vmatmul.bf16.gmra.mxu0 %v179
    %v642 = vpop.f32.mrf.mxu0
    %v643 = vadd.f32 0.0, %v642
    %v644 = vpop.f32.mrf.mxu0
    %v645 = vadd.f32 0.0, %v644
    %646 = vmatmul.bf16.gmra.mxu0 %v180
    %v647 = vpop.f32.mrf.mxu0
    %v648 = vadd.f32 0.0, %v647
    %v649 = vpop.f32.mrf.mxu0
    %v650 = vadd.f32 0.0, %v649
    %651 = vmatmul.bf16.gmra.mxu0 %v181
    %v652 = vpop.f32.mrf.mxu0
    %v653 = vadd.f32 0.0, %v652
    %v654 = vpop.f32.mrf.mxu0
    %v655 = vadd.f32 0.0, %v654
    %656 = vdwg.mxu0
    %657 = vmatpush.bf16.msra.mxu0 %v441
    %658 = vmatpush.bf16.msra.mxu0 %v433
    %659 = vmatpush.bf16.msra.mxu0 %v425
    %660 = vmatpush.bf16.msra.mxu0 %v417
    %661 = vmatpush.bf16.msra.mxu0 %v409
    %662 = vmatpush.bf16.msra.mxu0 %v401
    %663 = vmatpush.bf16.msra.mxu0 %v393
    %664 = vmatpush.bf16.msra.mxu0 %v385
    %665 = vmatmul.bf16.gmra.mxu0 %v174
    %v666 = vpop.f32.mrf.mxu0
    %v667 = vadd.f32 0.0, %v666
    %v668 = vpop.f32.mrf.mxu0
    %v669 = vadd.f32 0.0, %v668
    %670 = vmatmul.bf16.gmra.mxu0 %v175
    %v671 = vpop.f32.mrf.mxu0
    %v672 = vadd.f32 0.0, %v671
    %v673 = vpop.f32.mrf.mxu0
    %v674 = vadd.f32 0.0, %v673
    %675 = vmatmul.bf16.gmra.mxu0 %v176
    %v676 = vpop.f32.mrf.mxu0
    %v677 = vadd.f32 0.0, %v676
    %v678 = vpop.f32.mrf.mxu0
    %v679 = vadd.f32 0.0, %v678
    %680 = vmatmul.bf16.gmra.mxu0 %v177
    %v681 = vpop.f32.mrf.mxu0
    %v682 = vadd.f32 0.0, %v681
    %v683 = vpop.f32.mrf.mxu0
    %v684 = vadd.f32 0.0, %v683
    %685 = vmatmul.bf16.gmra.mxu0 %v178
    %v686 = vpop.f32.mrf.mxu0
    %v687 = vadd.f32 0.0, %v686
    %v688 = vpop.f32.mrf.mxu0
    %v689 = vadd.f32 0.0, %v688
    %690 = vmatmul.bf16.gmra.mxu0 %v179
    %v691 = vpop.f32.mrf.mxu0
    %v692 = vadd.f32 0.0, %v691
    %v693 = vpop.f32.mrf.mxu0
    %v694 = vadd.f32 0.0, %v693
    %695 = vmatmul.bf16.gmra.mxu0 %v180
    %v696 = vpop.f32.mrf.mxu0
    %v697 = vadd.f32 0.0, %v696
    %v698 = vpop.f32.mrf.mxu0
    %v699 = vadd.f32 0.0, %v698
    %700 = vmatmul.bf16.gmra.mxu0 %v181
    %v701 = vpop.f32.mrf.mxu0
    %v702 = vadd.f32 0.0, %v701
    %v703 = vpop.f32.mrf.mxu0
    %v704 = vadd.f32 0.0, %v703
    %705 = vdwg.mxu0
    %706 = vmatpush.bf16.msra.mxu0 %v442
    %707 = vmatpush.bf16.msra.mxu0 %v434
    %708 = vmatpush.bf16.msra.mxu0 %v426
    %709 = vmatpush.bf16.msra.mxu0 %v418
    %710 = vmatpush.bf16.msra.mxu0 %v410
    %711 = vmatpush.bf16.msra.mxu0 %v402
    %712 = vmatpush.bf16.msra.mxu0 %v394
    %713 = vmatpush.bf16.msra.mxu0 %v386
    %714 = vmatmul.bf16.gmra.mxu0 %v174
    %v715 = vpop.f32.mrf.mxu0
    %v716 = vadd.f32 0.0, %v715
    %v717 = vpop.f32.mrf.mxu0
    %v718 = vadd.f32 0.0, %v717
    %719 = vmatmul.bf16.gmra.mxu0 %v175
    %v720 = vpop.f32.mrf.mxu0
    %v721 = vadd.f32 0.0, %v720
    %v722 = vpop.f32.mrf.mxu0
    %v723 = vadd.f32 0.0, %v722
    %724 = vmatmul.bf16.gmra.mxu0 %v176
    %v725 = vpop.f32.mrf.mxu0
    %v726 = vadd.f32 0.0, %v725
    %v727 = vpop.f32.mrf.mxu0
    %v728 = vadd.f32 0.0, %v727
    %729 = vmatmul.bf16.gmra.mxu0 %v177
    %v730 = vpop.f32.mrf.mxu0
    %v731 = vadd.f32 0.0, %v730
    %v732 = vpop.f32.mrf.mxu0
    %v733 = vadd.f32 0.0, %v732
    %734 = vmatmul.bf16.gmra.mxu0 %v178
    %v735 = vpop.f32.mrf.mxu0
    %v736 = vadd.f32 0.0, %v735
    %v737 = vpop.f32.mrf.mxu0
    %v738 = vadd.f32 0.0, %v737
    %739 = vmatmul.bf16.gmra.mxu0 %v179
    %v740 = vpop.f32.mrf.mxu0
    %v741 = vadd.f32 0.0, %v740
    %v742 = vpop.f32.mrf.mxu0
    %v743 = vadd.f32 0.0, %v742
    %744 = vmatmul.bf16.gmra.mxu0 %v180
    %v745 = vpop.f32.mrf.mxu0
    %v746 = vadd.f32 0.0, %v745
    %v747 = vpop.f32.mrf.mxu0
    %v748 = vadd.f32 0.0, %v747
    %749 = vmatmul.bf16.gmra.mxu0 %v181
    %v750 = vpop.f32.mrf.mxu0
    %v751 = vadd.f32 0.0, %v750
    %v752 = vpop.f32.mrf.mxu0
    %v753 = vadd.f32 0.0, %v752
    %754 = vdwg.mxu0
    %755 = vmatpush.bf16.msra.mxu0 %v443
    %756 = vmatpush.bf16.msra.mxu0 %v435
    %757 = vmatpush.bf16.msra.mxu0 %v427
    %758 = vmatpush.bf16.msra.mxu0 %v419
    %759 = vmatpush.bf16.msra.mxu0 %v411
    %760 = vmatpush.bf16.msra.mxu0 %v403
    %761 = vmatpush.bf16.msra.mxu0 %v395
    %762 = vmatpush.bf16.msra.mxu0 %v387
    %763 = vmatmul.bf16.gmra.mxu0 %v174
    %v764 = vpop.f32.mrf.mxu0
    %v765 = vadd.f32 0.0, %v764
    %v766 = vpop.f32.mrf.mxu0
    %v767 = vadd.f32 0.0, %v766
    %768 = vmatmul.bf16.gmra.mxu0 %v175
    %v769 = vpop.f32.mrf.mxu0
    %v770 = vadd.f32 0.0, %v769
    %v771 = vpop.f32.mrf.mxu0
    %v772 = vadd.f32 0.0, %v771
    %773 = vmatmul.bf16.gmra.mxu0 %v176
    %v774 = vpop.f32.mrf.mxu0
    %v775 = vadd.f32 0.0, %v774
    %v776 = vpop.f32.mrf.mxu0
    %v777 = vadd.f32 0.0, %v776
    %778 = vmatmul.bf16.gmra.mxu0 %v177
    %v779 = vpop.f32.mrf.mxu0
    %v780 = vadd.f32 0.0, %v779
    %v781 = vpop.f32.mrf.mxu0
    %v782 = vadd.f32 0.0, %v781
    %783 = vmatmul.bf16.gmra.mxu0 %v178
    %v784 = vpop.f32.mrf.mxu0
    %v785 = vadd.f32 0.0, %v784
    %v786 = vpop.f32.mrf.mxu0
    %v787 = vadd.f32 0.0, %v786
    %788 = vmatmul.bf16.gmra.mxu0 %v179
    %v789 = vpop.f32.mrf.mxu0
    %v790 = vadd.f32 0.0, %v789
    %v791 = vpop.f32.mrf.mxu0
    %v792 = vadd.f32 0.0, %v791
    %793 = vmatmul.bf16.gmra.mxu0 %v180
    %v794 = vpop.f32.mrf.mxu0
    %v795 = vadd.f32 0.0, %v794
    %v796 = vpop.f32.mrf.mxu0
    %v797 = vadd.f32 0.0, %v796
    %798 = vmatmul.bf16.gmra.mxu0 %v181
    %v799 = vpop.f32.mrf.mxu0
    %v800 = vadd.f32 0.0, %v799
    %v801 = vpop.f32.mrf.mxu0
    %v802 = vadd.f32 0.0, %v801
    %803 = vdwg.mxu0
    %804 = vmatpush.bf16.msra.mxu0 %v444
    %805 = vmatpush.bf16.msra.mxu0 %v436
    %806 = vmatpush.bf16.msra.mxu0 %v428
    %807 = vmatpush.bf16.msra.mxu0 %v420
    %808 = vmatpush.bf16.msra.mxu0 %v412
    %809 = vmatpush.bf16.msra.mxu0 %v404
    %810 = vmatpush.bf16.msra.mxu0 %v396
    %811 = vmatpush.bf16.msra.mxu0 %v388
    %812 = vmatmul.bf16.gmra.mxu0 %v174
    %v813 = vpop.f32.mrf.mxu0
    %v814 = vadd.f32 0.0, %v813
    %v815 = vpop.f32.mrf.mxu0
    %v816 = vadd.f32 0.0, %v815
    %817 = vmatmul.bf16.gmra.mxu0 %v175
    %v818 = vpop.f32.mrf.mxu0
    %v819 = vadd.f32 0.0, %v818
    %v820 = vpop.f32.mrf.mxu0
    %v821 = vadd.f32 0.0, %v820
    %822 = vmatmul.bf16.gmra.mxu0 %v176
    %v823 = vpop.f32.mrf.mxu0
    %v824 = vadd.f32 0.0, %v823
    %v825 = vpop.f32.mrf.mxu0
    %v826 = vadd.f32 0.0, %v825
    %827 = vmatmul.bf16.gmra.mxu0 %v177
    %v828 = vpop.f32.mrf.mxu0
    %v829 = vadd.f32 0.0, %v828
    %v830 = vpop.f32.mrf.mxu0
    %v831 = vadd.f32 0.0, %v830
    %832 = vmatmul.bf16.gmra.mxu0 %v178
    %v833 = vpop.f32.mrf.mxu0
    %v834 = vadd.f32 0.0, %v833
    %v835 = vpop.f32.mrf.mxu0
    %v836 = vadd.f32 0.0, %v835
    %837 = vmatmul.bf16.gmra.mxu0 %v179
    %v838 = vpop.f32.mrf.mxu0
    %v839 = vadd.f32 0.0, %v838
    %v840 = vpop.f32.mrf.mxu0
    %v841 = vadd.f32 0.0, %v840
    %842 = vmatmul.bf16.gmra.mxu0 %v180
    %v843 = vpop.f32.mrf.mxu0
    %v844 = vadd.f32 0.0, %v843
    %v845 = vpop.f32.mrf.mxu0
    %v846 = vadd.f32 0.0, %v845
    %847 = vmatmul.bf16.gmra.mxu0 %v181
    %v848 = vpop.f32.mrf.mxu0
    %v849 = vadd.f32 0.0, %v848
    %v850 = vpop.f32.mrf.mxu0
    %v851 = vadd.f32 0.0, %v850
    %852 = vdwg.mxu0
    %853 = vmatpush.bf16.msra.mxu0 %v445
    %854 = vmatpush.bf16.msra.mxu0 %v437
    %855 = vmatpush.bf16.msra.mxu0 %v429
    %856 = vmatpush.bf16.msra.mxu0 %v421
    %857 = vmatpush.bf16.msra.mxu0 %v413
    %858 = vmatpush.bf16.msra.mxu0 %v405
    %859 = vmatpush.bf16.msra.mxu0 %v397
    %860 = vmatpush.bf16.msra.mxu0 %v389
    %861 = vmatmul.bf16.gmra.mxu0 %v174
    %v862 = vpop.f32.mrf.mxu0
    %v863 = vadd.f32 0.0, %v862
    %v864 = vpop.f32.mrf.mxu0
    %v865 = vadd.f32 0.0, %v864
    %866 = vmatmul.bf16.gmra.mxu0 %v175
    %v867 = vpop.f32.mrf.mxu0
    %v868 = vadd.f32 0.0, %v867
    %v869 = vpop.f32.mrf.mxu0
    %v870 = vadd.f32 0.0, %v869
    %871 = vmatmul.bf16.gmra.mxu0 %v176
    %v872 = vpop.f32.mrf.mxu0
    %v873 = vadd.f32 0.0, %v872
    %v874 = vpop.f32.mrf.mxu0
    %v875 = vadd.f32 0.0, %v874
    %876 = vmatmul.bf16.gmra.mxu0 %v177
    %v877 = vpop.f32.mrf.mxu0
    %v878 = vadd.f32 0.0, %v877
    %v879 = vpop.f32.mrf.mxu0
    %v880 = vadd.f32 0.0, %v879
    %881 = vmatmul.bf16.gmra.mxu0 %v178
    %v882 = vpop.f32.mrf.mxu0
    %v883 = vadd.f32 0.0, %v882
    %v884 = vpop.f32.mrf.mxu0
    %v885 = vadd.f32 0.0, %v884
    %886 = vmatmul.bf16.gmra.mxu0 %v179
    %v887 = vpop.f32.mrf.mxu0
    %v888 = vadd.f32 0.0, %v887
    %v889 = vpop.f32.mrf.mxu0
    %v890 = vadd.f32 0.0, %v889
    %891 = vmatmul.bf16.gmra.mxu0 %v180
    %v892 = vpop.f32.mrf.mxu0
    %v893 = vadd.f32 0.0, %v892
    %v894 = vpop.f32.mrf.mxu0
    %v895 = vadd.f32 0.0, %v894
    %896 = vmatmul.bf16.gmra.mxu0 %v181
    %v897 = vpop.f32.mrf.mxu0
    %v898 = vadd.f32 0.0, %v897
    %v899 = vpop.f32.mrf.mxu0
    %v900 = vadd.f32 0.0, %v899
    %901 = vdwg.mxu0
    %v902 = vmax.f32 %v520, %v522
    %v903 = vrot.slane %v902, 4
    %v904 = vmax.f32 %v902, %v903
    %v905 = vrot.slane %v904, 2
    %v906 = vmax.f32 %v904, %v905
    %v907 = vrot.slane %v906, 1
    %v908 = vmax.f32 %v906, %v907
    %v909 = vmax.f32 %v569, %v571
    %v910 = vrot.slane %v909, 4
    %v911 = vmax.f32 %v909, %v910
    %v912 = vrot.slane %v911, 2
    %v913 = vmax.f32 %v911, %v912
    %v914 = vrot.slane %v913, 1
    %v915 = vmax.f32 %v913, %v914
    %v916 = vmax.f32 %v618, %v620
    %v917 = vrot.slane %v916, 4
    %v918 = vmax.f32 %v916, %v917
    %v919 = vrot.slane %v918, 2
    %v920 = vmax.f32 %v918, %v919
    %v921 = vrot.slane %v920, 1
    %v922 = vmax.f32 %v920, %v921
    %v923 = vmax.f32 %v667, %v669
    %v924 = vrot.slane %v923, 4
    %v925 = vmax.f32 %v923, %v924
    %v926 = vrot.slane %v925, 2
    %v927 = vmax.f32 %v925, %v926
    %v928 = vrot.slane %v927, 1
    %v929 = vmax.f32 %v927, %v928
    %v930 = vmax.f32 %v716, %v718
    %v931 = vrot.slane %v930, 4
    %v932 = vmax.f32 %v930, %v931
    %v933 = vrot.slane %v932, 2
    %v934 = vmax.f32 %v932, %v933
    %v935 = vrot.slane %v934, 1
    %v936 = vmax.f32 %v934, %v935
    %v937 = vmax.f32 %v765, %v767
    %v938 = vrot.slane %v937, 4
    %v939 = vmax.f32 %v937, %v938
    %v940 = vrot.slane %v939, 2
    %v941 = vmax.f32 %v939, %v940
    %v942 = vrot.slane %v941, 1
    %v943 = vmax.f32 %v941, %v942
    %v944 = vmax.f32 %v814, %v816
    %v945 = vrot.slane %v944, 4
    %v946 = vmax.f32 %v944, %v945
    %v947 = vrot.slane %v946, 2
    %v948 = vmax.f32 %v946, %v947
    %v949 = vrot.slane %v948, 1
    %v950 = vmax.f32 %v948, %v949
    %v951 = vmax.f32 %v863, %v865
    %v952 = vrot.slane %v951, 4
    %v953 = vmax.f32 %v951, %v952
    %v954 = vrot.slane %v953, 2
    %v955 = vmax.f32 %v953, %v954
    %v956 = vrot.slane %v955, 1
    %v957 = vmax.f32 %v955, %v956
    %v958 = vmax.f32 %v525, %v527
    %v959 = vrot.slane %v958, 4
    %v960 = vmax.f32 %v958, %v959
    %v961 = vrot.slane %v960, 2
    %v962 = vmax.f32 %v960, %v961
    %v963 = vrot.slane %v962, 1
    %v964 = vmax.f32 %v962, %v963
    %v965 = vmax.f32 %v574, %v576
    %v966 = vrot.slane %v965, 4
    %v967 = vmax.f32 %v965, %v966
    %v968 = vrot.slane %v967, 2
    %v969 = vmax.f32 %v967, %v968
    %v970 = vrot.slane %v969, 1
    %v971 = vmax.f32 %v969, %v970
    %v972 = vmax.f32 %v623, %v625
    %v973 = vrot.slane %v972, 4
    %v974 = vmax.f32 %v972, %v973
    %v975 = vrot.slane %v974, 2
    %v976 = vmax.f32 %v974, %v975
    %v977 = vrot.slane %v976, 1
    %v978 = vmax.f32 %v976, %v977
    %v979 = vmax.f32 %v672, %v674
    %v980 = vrot.slane %v979, 4
    %v981 = vmax.f32 %v979, %v980
    %v982 = vrot.slane %v981, 2
    %v983 = vmax.f32 %v981, %v982
    %v984 = vrot.slane %v983, 1
    %v985 = vmax.f32 %v983, %v984
    %v986 = vmax.f32 %v721, %v723
    %v987 = vrot.slane %v986, 4
    %v988 = vmax.f32 %v986, %v987
    %v989 = vrot.slane %v988, 2
    %v990 = vmax.f32 %v988, %v989
    %v991 = vrot.slane %v990, 1
    %v992 = vmax.f32 %v990, %v991
    %v993 = vmax.f32 %v770, %v772
    %v994 = vrot.slane %v993, 4
    %v995 = vmax.f32 %v993, %v994
    %v996 = vrot.slane %v995, 2
    %v997 = vmax.f32 %v995, %v996
    %v998 = vrot.slane %v997, 1
    %v999 = vmax.f32 %v997, %v998
    %v1000 = vmax.f32 %v819, %v821
    %v1001 = vrot.slane %v1000, 4
    %v1002 = vmax.f32 %v1000, %v1001
    %v1003 = vrot.slane %v1002, 2
    %v1004 = vmax.f32 %v1002, %v1003
    %v1005 = vrot.slane %v1004, 1
    %v1006 = vmax.f32 %v1004, %v1005
    %v1007 = vmax.f32 %v868, %v870
    %v1008 = vrot.slane %v1007, 4
    %v1009 = vmax.f32 %v1007, %v1008
    %v1010 = vrot.slane %v1009, 2
    %v1011 = vmax.f32 %v1009, %v1010
    %v1012 = vrot.slane %v1011, 1
    %v1013 = vmax.f32 %v1011, %v1012
    %v1014 = vmax.f32 %v530, %v532
    %v1015 = vrot.slane %v1014, 4
    %v1016 = vmax.f32 %v1014, %v1015
    %v1017 = vrot.slane %v1016, 2
    %v1018 = vmax.f32 %v1016, %v1017
    %v1019 = vrot.slane %v1018, 1
    %v1020 = vmax.f32 %v1018, %v1019
    %v1021 = vmax.f32 %v579, %v581
    %v1022 = vrot.slane %v1021, 4
    %v1023 = vmax.f32 %v1021, %v1022
    %v1024 = vrot.slane %v1023, 2
    %v1025 = vmax.f32 %v1023, %v1024
    %v1026 = vrot.slane %v1025, 1
    %v1027 = vmax.f32 %v1025, %v1026
    %v1028 = vmax.f32 %v628, %v630
    %v1029 = vrot.slane %v1028, 4
    %v1030 = vmax.f32 %v1028, %v1029
    %v1031 = vrot.slane %v1030, 2
    %v1032 = vmax.f32 %v1030, %v1031
    %v1033 = vrot.slane %v1032, 1
    %v1034 = vmax.f32 %v1032, %v1033
    %v1035 = vmax.f32 %v677, %v679
    %v1036 = vrot.slane %v1035, 4
    %v1037 = vmax.f32 %v1035, %v1036
    %v1038 = vrot.slane %v1037, 2
    %v1039 = vmax.f32 %v1037, %v1038
    %v1040 = vrot.slane %v1039, 1
    %v1041 = vmax.f32 %v1039, %v1040
    %v1042 = vmax.f32 %v726, %v728
    %v1043 = vrot.slane %v1042, 4
    %v1044 = vmax.f32 %v1042, %v1043
    %v1045 = vrot.slane %v1044, 2
    %v1046 = vmax.f32 %v1044, %v1045
    %v1047 = vrot.slane %v1046, 1
    %v1048 = vmax.f32 %v1046, %v1047
    %v1049 = vmax.f32 %v775, %v777
    %v1050 = vrot.slane %v1049, 4
    %v1051 = vmax.f32 %v1049, %v1050
    %v1052 = vrot.slane %v1051, 2
    %v1053 = vmax.f32 %v1051, %v1052
    %v1054 = vrot.slane %v1053, 1
    %v1055 = vmax.f32 %v1053, %v1054
    %v1056 = vmax.f32 %v824, %v826
    %v1057 = vrot.slane %v1056, 4
    %v1058 = vmax.f32 %v1056, %v1057
    %v1059 = vrot.slane %v1058, 2
    %v1060 = vmax.f32 %v1058, %v1059
    %v1061 = vrot.slane %v1060, 1
    %v1062 = vmax.f32 %v1060, %v1061
    %v1063 = vmax.f32 %v873, %v875
    %v1064 = vrot.slane %v1063, 4
    %v1065 = vmax.f32 %v1063, %v1064
    %v1066 = vrot.slane %v1065, 2
    %v1067 = vmax.f32 %v1065, %v1066
    %v1068 = vrot.slane %v1067, 1
    %v1069 = vmax.f32 %v1067, %v1068
    %v1070 = vmax.f32 %v535, %v537
    %v1071 = vrot.slane %v1070, 4
    %v1072 = vmax.f32 %v1070, %v1071
    %v1073 = vrot.slane %v1072, 2
    %v1074 = vmax.f32 %v1072, %v1073
    %v1075 = vrot.slane %v1074, 1
    %v1076 = vmax.f32 %v1074, %v1075
    %v1077 = vmax.f32 %v584, %v586
    %v1078 = vrot.slane %v1077, 4
    %v1079 = vmax.f32 %v1077, %v1078
    %v1080 = vrot.slane %v1079, 2
    %v1081 = vmax.f32 %v1079, %v1080
    %v1082 = vrot.slane %v1081, 1
    %v1083 = vmax.f32 %v1081, %v1082
    %v1084 = vmax.f32 %v633, %v635
    %v1085 = vrot.slane %v1084, 4
    %v1086 = vmax.f32 %v1084, %v1085
    %v1087 = vrot.slane %v1086, 2
    %v1088 = vmax.f32 %v1086, %v1087
    %v1089 = vrot.slane %v1088, 1
    %v1090 = vmax.f32 %v1088, %v1089
    %v1091 = vmax.f32 %v682, %v684
    %v1092 = vrot.slane %v1091, 4
    %v1093 = vmax.f32 %v1091, %v1092
    %v1094 = vrot.slane %v1093, 2
    %v1095 = vmax.f32 %v1093, %v1094
    %v1096 = vrot.slane %v1095, 1
    %v1097 = vmax.f32 %v1095, %v1096
    %v1098 = vmax.f32 %v731, %v733
    %v1099 = vrot.slane %v1098, 4
    %v1100 = vmax.f32 %v1098, %v1099
    %v1101 = vrot.slane %v1100, 2
    %v1102 = vmax.f32 %v1100, %v1101
    %v1103 = vrot.slane %v1102, 1
    %v1104 = vmax.f32 %v1102, %v1103
    %v1105 = vmax.f32 %v780, %v782
    %v1106 = vrot.slane %v1105, 4
    %v1107 = vmax.f32 %v1105, %v1106
    %v1108 = vrot.slane %v1107, 2
    %v1109 = vmax.f32 %v1107, %v1108
    %v1110 = vrot.slane %v1109, 1
    %v1111 = vmax.f32 %v1109, %v1110
    %v1112 = vmax.f32 %v829, %v831
    %v1113 = vrot.slane %v1112, 4
    %v1114 = vmax.f32 %v1112, %v1113
    %v1115 = vrot.slane %v1114, 2
    %v1116 = vmax.f32 %v1114, %v1115
    %v1117 = vrot.slane %v1116, 1
    %v1118 = vmax.f32 %v1116, %v1117
    %v1119 = vmax.f32 %v878, %v880
    %v1120 = vrot.slane %v1119, 4
    %v1121 = vmax.f32 %v1119, %v1120
    %v1122 = vrot.slane %v1121, 2
    %v1123 = vmax.f32 %v1121, %v1122
    %v1124 = vrot.slane %v1123, 1
    %v1125 = vmax.f32 %v1123, %v1124
    %v1126 = vmax.f32 %v540, %v542
    %v1127 = vrot.slane %v1126, 4
    %v1128 = vmax.f32 %v1126, %v1127
    %v1129 = vrot.slane %v1128, 2
    %v1130 = vmax.f32 %v1128, %v1129
    %v1131 = vrot.slane %v1130, 1
    %v1132 = vmax.f32 %v1130, %v1131
    %v1133 = vmax.f32 %v589, %v591
    %v1134 = vrot.slane %v1133, 4
    %v1135 = vmax.f32 %v1133, %v1134
    %v1136 = vrot.slane %v1135, 2
    %v1137 = vmax.f32 %v1135, %v1136
    %v1138 = vrot.slane %v1137, 1
    %v1139 = vmax.f32 %v1137, %v1138
    %v1140 = vmax.f32 %v638, %v640
    %v1141 = vrot.slane %v1140, 4
    %v1142 = vmax.f32 %v1140, %v1141
    %v1143 = vrot.slane %v1142, 2
    %v1144 = vmax.f32 %v1142, %v1143
    %v1145 = vrot.slane %v1144, 1
    %v1146 = vmax.f32 %v1144, %v1145
    %v1147 = vmax.f32 %v687, %v689
    %v1148 = vrot.slane %v1147, 4
    %v1149 = vmax.f32 %v1147, %v1148
    %v1150 = vrot.slane %v1149, 2
    %v1151 = vmax.f32 %v1149, %v1150
    %v1152 = vrot.slane %v1151, 1
    %v1153 = vmax.f32 %v1151, %v1152
    %v1154 = vmax.f32 %v736, %v738
    %v1155 = vrot.slane %v1154, 4
    %v1156 = vmax.f32 %v1154, %v1155
    %v1157 = vrot.slane %v1156, 2
    %v1158 = vmax.f32 %v1156, %v1157
    %v1159 = vrot.slane %v1158, 1
    %v1160 = vmax.f32 %v1158, %v1159
    %v1161 = vmax.f32 %v785, %v787
    %v1162 = vrot.slane %v1161, 4
    %v1163 = vmax.f32 %v1161, %v1162
    %v1164 = vrot.slane %v1163, 2
    %v1165 = vmax.f32 %v1163, %v1164
    %v1166 = vrot.slane %v1165, 1
    %v1167 = vmax.f32 %v1165, %v1166
    %v1168 = vmax.f32 %v834, %v836
    %v1169 = vrot.slane %v1168, 4
    %v1170 = vmax.f32 %v1168, %v1169
    %v1171 = vrot.slane %v1170, 2
    %v1172 = vmax.f32 %v1170, %v1171
    %v1173 = vrot.slane %v1172, 1
    %v1174 = vmax.f32 %v1172, %v1173
    %v1175 = vmax.f32 %v883, %v885
    %v1176 = vrot.slane %v1175, 4
    %v1177 = vmax.f32 %v1175, %v1176
    %v1178 = vrot.slane %v1177, 2
    %v1179 = vmax.f32 %v1177, %v1178
    %v1180 = vrot.slane %v1179, 1
    %v1181 = vmax.f32 %v1179, %v1180
    %v1182 = vmax.f32 %v545, %v547
    %v1183 = vrot.slane %v1182, 4
    %v1184 = vmax.f32 %v1182, %v1183
    %v1185 = vrot.slane %v1184, 2
    %v1186 = vmax.f32 %v1184, %v1185
    %v1187 = vrot.slane %v1186, 1
    %v1188 = vmax.f32 %v1186, %v1187
    %v1189 = vmax.f32 %v594, %v596
    %v1190 = vrot.slane %v1189, 4
    %v1191 = vmax.f32 %v1189, %v1190
    %v1192 = vrot.slane %v1191, 2
    %v1193 = vmax.f32 %v1191, %v1192
    %v1194 = vrot.slane %v1193, 1
    %v1195 = vmax.f32 %v1193, %v1194
    %v1196 = vmax.f32 %v643, %v645
    %v1197 = vrot.slane %v1196, 4
    %v1198 = vmax.f32 %v1196, %v1197
    %v1199 = vrot.slane %v1198, 2
    %v1200 = vmax.f32 %v1198, %v1199
    %v1201 = vrot.slane %v1200, 1
    %v1202 = vmax.f32 %v1200, %v1201
    %v1203 = vmax.f32 %v692, %v694
    %v1204 = vrot.slane %v1203, 4
    %v1205 = vmax.f32 %v1203, %v1204
    %v1206 = vrot.slane %v1205, 2
    %v1207 = vmax.f32 %v1205, %v1206
    %v1208 = vrot.slane %v1207, 1
    %v1209 = vmax.f32 %v1207, %v1208
    %v1210 = vmax.f32 %v741, %v743
    %v1211 = vrot.slane %v1210, 4
    %v1212 = vmax.f32 %v1210, %v1211
    %v1213 = vrot.slane %v1212, 2
    %v1214 = vmax.f32 %v1212, %v1213
    %v1215 = vrot.slane %v1214, 1
    %v1216 = vmax.f32 %v1214, %v1215
    %v1217 = vmax.f32 %v790, %v792
    %v1218 = vrot.slane %v1217, 4
    %v1219 = vmax.f32 %v1217, %v1218
    %v1220 = vrot.slane %v1219, 2
    %v1221 = vmax.f32 %v1219, %v1220
    %v1222 = vrot.slane %v1221, 1
    %v1223 = vmax.f32 %v1221, %v1222
    %v1224 = vmax.f32 %v839, %v841
    %v1225 = vrot.slane %v1224, 4
    %v1226 = vmax.f32 %v1224, %v1225
    %v1227 = vrot.slane %v1226, 2
    %v1228 = vmax.f32 %v1226, %v1227
    %v1229 = vrot.slane %v1228, 1
    %v1230 = vmax.f32 %v1228, %v1229
    %v1231 = vmax.f32 %v888, %v890
    %v1232 = vrot.slane %v1231, 4
    %v1233 = vmax.f32 %v1231, %v1232
    %v1234 = vrot.slane %v1233, 2
    %v1235 = vmax.f32 %v1233, %v1234
    %v1236 = vrot.slane %v1235, 1
    %v1237 = vmax.f32 %v1235, %v1236
    %v1238 = vmax.f32 %v550, %v552
    %v1239 = vrot.slane %v1238, 4
    %v1240 = vmax.f32 %v1238, %v1239
    %v1241 = vrot.slane %v1240, 2
    %v1242 = vmax.f32 %v1240, %v1241
    %v1243 = vrot.slane %v1242, 1
    %v1244 = vmax.f32 %v1242, %v1243
    %v1245 = vmax.f32 %v599, %v601
    %v1246 = vrot.slane %v1245, 4
    %v1247 = vmax.f32 %v1245, %v1246
    %v1248 = vrot.slane %v1247, 2
    %v1249 = vmax.f32 %v1247, %v1248
    %v1250 = vrot.slane %v1249, 1
    %v1251 = vmax.f32 %v1249, %v1250
    %v1252 = vmax.f32 %v648, %v650
    %v1253 = vrot.slane %v1252, 4
    %v1254 = vmax.f32 %v1252, %v1253
    %v1255 = vrot.slane %v1254, 2
    %v1256 = vmax.f32 %v1254, %v1255
    %v1257 = vrot.slane %v1256, 1
    %v1258 = vmax.f32 %v1256, %v1257
    %v1259 = vmax.f32 %v697, %v699
    %v1260 = vrot.slane %v1259, 4
    %v1261 = vmax.f32 %v1259, %v1260
    %v1262 = vrot.slane %v1261, 2
    %v1263 = vmax.f32 %v1261, %v1262
    %v1264 = vrot.slane %v1263, 1
    %v1265 = vmax.f32 %v1263, %v1264
    %v1266 = vmax.f32 %v746, %v748
    %v1267 = vrot.slane %v1266, 4
    %v1268 = vmax.f32 %v1266, %v1267
    %v1269 = vrot.slane %v1268, 2
    %v1270 = vmax.f32 %v1268, %v1269
    %v1271 = vrot.slane %v1270, 1
    %v1272 = vmax.f32 %v1270, %v1271
    %v1273 = vmax.f32 %v795, %v797
    %v1274 = vrot.slane %v1273, 4
    %v1275 = vmax.f32 %v1273, %v1274
    %v1276 = vrot.slane %v1275, 2
    %v1277 = vmax.f32 %v1275, %v1276
    %v1278 = vrot.slane %v1277, 1
    %v1279 = vmax.f32 %v1277, %v1278
    %v1280 = vmax.f32 %v844, %v846
    %v1281 = vrot.slane %v1280, 4
    %v1282 = vmax.f32 %v1280, %v1281
    %v1283 = vrot.slane %v1282, 2
    %v1284 = vmax.f32 %v1282, %v1283
    %v1285 = vrot.slane %v1284, 1
    %v1286 = vmax.f32 %v1284, %v1285
    %v1287 = vmax.f32 %v893, %v895
    %v1288 = vrot.slane %v1287, 4
    %v1289 = vmax.f32 %v1287, %v1288
    %v1290 = vrot.slane %v1289, 2
    %v1291 = vmax.f32 %v1289, %v1290
    %v1292 = vrot.slane %v1291, 1
    %v1293 = vmax.f32 %v1291, %v1292
    %v1294 = vmax.f32 %v555, %v557
    %v1295 = vrot.slane %v1294, 4
    %v1296 = vmax.f32 %v1294, %v1295
    %v1297 = vrot.slane %v1296, 2
    %v1298 = vmax.f32 %v1296, %v1297
    %v1299 = vrot.slane %v1298, 1
    %v1300 = vmax.f32 %v1298, %v1299
    %v1301 = vmax.f32 %v604, %v606
    %v1302 = vrot.slane %v1301, 4
    %v1303 = vmax.f32 %v1301, %v1302
    %v1304 = vrot.slane %v1303, 2
    %v1305 = vmax.f32 %v1303, %v1304
    %v1306 = vrot.slane %v1305, 1
    %v1307 = vmax.f32 %v1305, %v1306
    %v1308 = vmax.f32 %v653, %v655
    %v1309 = vrot.slane %v1308, 4
    %v1310 = vmax.f32 %v1308, %v1309
    %v1311 = vrot.slane %v1310, 2
    %v1312 = vmax.f32 %v1310, %v1311
    %v1313 = vrot.slane %v1312, 1
    %v1314 = vmax.f32 %v1312, %v1313
    %v1315 = vmax.f32 %v702, %v704
    %v1316 = vrot.slane %v1315, 4
    %v1317 = vmax.f32 %v1315, %v1316
    %v1318 = vrot.slane %v1317, 2
    %v1319 = vmax.f32 %v1317, %v1318
    %v1320 = vrot.slane %v1319, 1
    %v1321 = vmax.f32 %v1319, %v1320
    %v1322 = vmax.f32 %v751, %v753
    %v1323 = vrot.slane %v1322, 4
    %v1324 = vmax.f32 %v1322, %v1323
    %v1325 = vrot.slane %v1324, 2
    %v1326 = vmax.f32 %v1324, %v1325
    %v1327 = vrot.slane %v1326, 1
    %v1328 = vmax.f32 %v1326, %v1327
    %v1329 = vmax.f32 %v800, %v802
    %v1330 = vrot.slane %v1329, 4
    %v1331 = vmax.f32 %v1329, %v1330
    %v1332 = vrot.slane %v1331, 2
    %v1333 = vmax.f32 %v1331, %v1332
    %v1334 = vrot.slane %v1333, 1
    %v1335 = vmax.f32 %v1333, %v1334
    %v1336 = vmax.f32 %v849, %v851
    %v1337 = vrot.slane %v1336, 4
    %v1338 = vmax.f32 %v1336, %v1337
    %v1339 = vrot.slane %v1338, 2
    %v1340 = vmax.f32 %v1338, %v1339
    %v1341 = vrot.slane %v1340, 1
    %v1342 = vmax.f32 %v1340, %v1341
    %v1343 = vmax.f32 %v898, %v900
    %v1344 = vrot.slane %v1343, 4
    %v1345 = vmax.f32 %v1343, %v1344
    %v1346 = vrot.slane %v1345, 2
    %v1347 = vmax.f32 %v1345, %v1346
    %v1348 = vrot.slane %v1347, 1
    %v1349 = vmax.f32 %v1347, %v1348
    %v1350 = vpack.c.bf16 %v908, %v908
    %v1351 = vpack.c.bf16 %v915, %v915
    %v1352 = vpack.c.bf16 %v922, %v922
    %v1353 = vpack.c.bf16 %v929, %v929
    %v1354 = vpack.c.bf16 %v936, %v936
    %v1355 = vpack.c.bf16 %v943, %v943
    %v1356 = vpack.c.bf16 %v950, %v950
    %v1357 = vpack.c.bf16 %v957, %v957
    %v1358 = vpack.c.bf16 %v964, %v964
    %v1359 = vpack.c.bf16 %v971, %v971
    %v1360 = vpack.c.bf16 %v978, %v978
    %v1361 = vpack.c.bf16 %v985, %v985
    %v1362 = vpack.c.bf16 %v992, %v992
    %v1363 = vpack.c.bf16 %v999, %v999
    %v1364 = vpack.c.bf16 %v1006, %v1006
    %v1365 = vpack.c.bf16 %v1013, %v1013
    %v1366 = vpack.c.bf16 %v1020, %v1020
    %v1367 = vpack.c.bf16 %v1027, %v1027
    %v1368 = vpack.c.bf16 %v1034, %v1034
    %v1369 = vpack.c.bf16 %v1041, %v1041
    %v1370 = vpack.c.bf16 %v1048, %v1048
    %v1371 = vpack.c.bf16 %v1055, %v1055
    %v1372 = vpack.c.bf16 %v1062, %v1062
    %v1373 = vpack.c.bf16 %v1069, %v1069
    %v1374 = vpack.c.bf16 %v1076, %v1076
    %v1375 = vpack.c.bf16 %v1083, %v1083
    %v1376 = vpack.c.bf16 %v1090, %v1090
    %v1377 = vpack.c.bf16 %v1097, %v1097
    %v1378 = vpack.c.bf16 %v1104, %v1104
    %v1379 = vpack.c.bf16 %v1111, %v1111
    %v1380 = vpack.c.bf16 %v1118, %v1118
    %v1381 = vpack.c.bf16 %v1125, %v1125
    %v1382 = vpack.c.bf16 %v1132, %v1132
    %v1383 = vpack.c.bf16 %v1139, %v1139
    %v1384 = vpack.c.bf16 %v1146, %v1146
    %v1385 = vpack.c.bf16 %v1153, %v1153
    %v1386 = vpack.c.bf16 %v1160, %v1160
    %v1387 = vpack.c.bf16 %v1167, %v1167
    %v1388 = vpack.c.bf16 %v1174, %v1174
    %v1389 = vpack.c.bf16 %v1181, %v1181
    %v1390 = vpack.c.bf16 %v1188, %v1188
    %v1391 = vpack.c.bf16 %v1195, %v1195
    %v1392 = vpack.c.bf16 %v1202, %v1202
    %v1393 = vpack.c.bf16 %v1209, %v1209
    %v1394 = vpack.c.bf16 %v1216, %v1216
    %v1395 = vpack.c.bf16 %v1223, %v1223
    %v1396 = vpack.c.bf16 %v1230, %v1230
    %v1397 = vpack.c.bf16 %v1237, %v1237
    %v1398 = vpack.c.bf16 %v1244, %v1244
    %v1399 = vpack.c.bf16 %v1251, %v1251
    %v1400 = vpack.c.bf16 %v1258, %v1258
    %v1401 = vpack.c.bf16 %v1265, %v1265
    %v1402 = vpack.c.bf16 %v1272, %v1272
    %v1403 = vpack.c.bf16 %v1279, %v1279
    %v1404 = vpack.c.bf16 %v1286, %v1286
    %v1405 = vpack.c.bf16 %v1293, %v1293
    %v1406 = vpack.c.bf16 %v1300, %v1300
    %v1407 = vpack.c.bf16 %v1307, %v1307
    %v1408 = vpack.c.bf16 %v1314, %v1314
    %v1409 = vpack.c.bf16 %v1321, %v1321
    %v1410 = vpack.c.bf16 %v1328, %v1328
    %v1411 = vpack.c.bf16 %v1335, %v1335
    %v1412 = vpack.c.bf16 %v1342, %v1342
    %v1413 = vpack.c.bf16 %v1349, %v1349
    %v1414 = vld [vmem:[#allocation7] sm:$0xf]
    %v1415 = vld [vmem:[#allocation7 + $0x4] sm:$0xf]
    %v1416 = vld [vmem:[#allocation7 + $0x8] sm:$0xf]
    %v1417 = vld [vmem:[#allocation7 + $0xc] sm:$0xf]
    %v1418 = vld [vmem:[#allocation7 + $0x10] sm:$0xf]
    %v1419 = vld [vmem:[#allocation7 + $0x14] sm:$0xf]
    %v1420 = vld [vmem:[#allocation7 + $0x18] sm:$0xf]
    %v1421 = vld [vmem:[#allocation7 + $0x1c] sm:$0xf]
    %v1422 = vld [vmem:[#allocation7 + $0x20] sm:$0xf]
    %v1423 = vld [vmem:[#allocation7 + $0x24] sm:$0xf]
    %v1424 = vld [vmem:[#allocation7 + $0x28] sm:$0xf]
    %v1425 = vld [vmem:[#allocation7 + $0x2c] sm:$0xf]
    %v1426 = vld [vmem:[#allocation7 + $0x30] sm:$0xf]
    %v1427 = vld [vmem:[#allocation7 + $0x34] sm:$0xf]
    %v1428 = vld [vmem:[#allocation7 + $0x38] sm:$0xf]
    %v1429 = vld [vmem:[#allocation7 + $0x3c] sm:$0xf]
    %v1430 = vld [vmem:[#allocation7 + $0x40] sm:$0xf]
    %v1431 = vld [vmem:[#allocation7 + $0x44] sm:$0xf]
    %v1432 = vld [vmem:[#allocation7 + $0x48] sm:$0xf]
    %v1433 = vld [vmem:[#allocation7 + $0x4c] sm:$0xf]
    %v1434 = vld [vmem:[#allocation7 + $0x50] sm:$0xf]
    %v1435 = vld [vmem:[#allocation7 + $0x54] sm:$0xf]
    %v1436 = vld [vmem:[#allocation7 + $0x58] sm:$0xf]
    %v1437 = vld [vmem:[#allocation7 + $0x5c] sm:$0xf]
    %v1438 = vld [vmem:[#allocation7 + $0x60] sm:$0xf]
    %v1439 = vld [vmem:[#allocation7 + $0x64] sm:$0xf]
    %v1440 = vld [vmem:[#allocation7 + $0x68] sm:$0xf]
    %v1441 = vld [vmem:[#allocation7 + $0x6c] sm:$0xf]
    %v1442 = vld [vmem:[#allocation7 + $0x70] sm:$0xf]
    %v1443 = vld [vmem:[#allocation7 + $0x74] sm:$0xf]
    %v1444 = vld [vmem:[#allocation7 + $0x78] sm:$0xf]
    %v1445 = vld [vmem:[#allocation7 + $0x7c] sm:$0xf]
    %v1446 = vld [vmem:[#allocation7 + $0x80] sm:$0xf]
    %v1447 = vld [vmem:[#allocation7 + $0x84] sm:$0xf]
    %v1448 = vld [vmem:[#allocation7 + $0x88] sm:$0xf]
    %v1449 = vld [vmem:[#allocation7 + $0x8c] sm:$0xf]
    %v1450 = vld [vmem:[#allocation7 + $0x90] sm:$0xf]
    %v1451 = vld [vmem:[#allocation7 + $0x94] sm:$0xf]
    %v1452 = vld [vmem:[#allocation7 + $0x98] sm:$0xf]
    %v1453 = vld [vmem:[#allocation7 + $0x9c] sm:$0xf]
    %v1454 = vld [vmem:[#allocation7 + $0xa0] sm:$0xf]
    %v1455 = vld [vmem:[#allocation7 + $0xa4] sm:$0xf]
    %v1456 = vld [vmem:[#allocation7 + $0xa8] sm:$0xf]
    %v1457 = vld [vmem:[#allocation7 + $0xac] sm:$0xf]
    %v1458 = vld [vmem:[#allocation7 + $0xb0] sm:$0xf]
    %v1459 = vld [vmem:[#allocation7 + $0xb4] sm:$0xf]
    %v1460 = vld [vmem:[#allocation7 + $0xb8] sm:$0xf]
    %v1461 = vld [vmem:[#allocation7 + $0xbc] sm:$0xf]
    %v1462 = vld [vmem:[#allocation7 + $0xc0] sm:$0xf]
    %v1463 = vld [vmem:[#allocation7 + $0xc4] sm:$0xf]
    %v1464 = vld [vmem:[#allocation7 + $0xc8] sm:$0xf]
    %v1465 = vld [vmem:[#allocation7 + $0xcc] sm:$0xf]
    %v1466 = vld [vmem:[#allocation7 + $0xd0] sm:$0xf]
    %v1467 = vld [vmem:[#allocation7 + $0xd4] sm:$0xf]
    %v1468 = vld [vmem:[#allocation7 + $0xd8] sm:$0xf]
    %v1469 = vld [vmem:[#allocation7 + $0xdc] sm:$0xf]
    %v1470 = vld [vmem:[#allocation7 + $0xe0] sm:$0xf]
    %v1471 = vld [vmem:[#allocation7 + $0xe4] sm:$0xf]
    %v1472 = vld [vmem:[#allocation7 + $0xe8] sm:$0xf]
    %v1473 = vld [vmem:[#allocation7 + $0xec] sm:$0xf]
    %v1474 = vld [vmem:[#allocation7 + $0xf0] sm:$0xf]
    %v1475 = vld [vmem:[#allocation7 + $0xf4] sm:$0xf]
    %v1476 = vld [vmem:[#allocation7 + $0xf8] sm:$0xf]
    %v1477 = vld [vmem:[#allocation7 + $0xfc] sm:$0xf]
    %v1478 = vld [vmem:[#allocation7 + $0x100] sm:$0xf]
    %v1479 = vld [vmem:[#allocation7 + $0x104] sm:$0xf]
    %v1480 = vld [vmem:[#allocation7 + $0x108] sm:$0xf]
    %v1481 = vld [vmem:[#allocation7 + $0x10c] sm:$0xf]
    %v1482 = vld [vmem:[#allocation7 + $0x110] sm:$0xf]
    %v1483 = vld [vmem:[#allocation7 + $0x114] sm:$0xf]
    %v1484 = vld [vmem:[#allocation7 + $0x118] sm:$0xf]
    %v1485 = vld [vmem:[#allocation7 + $0x11c] sm:$0xf]
    %v1486 = vld [vmem:[#allocation7 + $0x120] sm:$0xf]
    %v1487 = vld [vmem:[#allocation7 + $0x124] sm:$0xf]
    %v1488 = vld [vmem:[#allocation7 + $0x128] sm:$0xf]
    %v1489 = vld [vmem:[#allocation7 + $0x12c] sm:$0xf]
    %v1490 = vld [vmem:[#allocation7 + $0x130] sm:$0xf]
    %v1491 = vld [vmem:[#allocation7 + $0x134] sm:$0xf]
    %v1492 = vld [vmem:[#allocation7 + $0x138] sm:$0xf]
    %v1493 = vld [vmem:[#allocation7 + $0x13c] sm:$0xf]
    %v1494 = vld [vmem:[#allocation7 + $0x140] sm:$0xf]
    %v1495 = vld [vmem:[#allocation7 + $0x144] sm:$0xf]
    %v1496 = vld [vmem:[#allocation7 + $0x148] sm:$0xf]
    %v1497 = vld [vmem:[#allocation7 + $0x14c] sm:$0xf]
    %v1498 = vld [vmem:[#allocation7 + $0x150] sm:$0xf]
    %v1499 = vld [vmem:[#allocation7 + $0x154] sm:$0xf]
    %v1500 = vld [vmem:[#allocation7 + $0x158] sm:$0xf]
    %v1501 = vld [vmem:[#allocation7 + $0x15c] sm:$0xf]
    %v1502 = vld [vmem:[#allocation7 + $0x160] sm:$0xf]
    %v1503 = vld [vmem:[#allocation7 + $0x164] sm:$0xf]
    %v1504 = vld [vmem:[#allocation7 + $0x168] sm:$0xf]
    %v1505 = vld [vmem:[#allocation7 + $0x16c] sm:$0xf]
    %v1506 = vld [vmem:[#allocation7 + $0x170] sm:$0xf]
    %v1507 = vld [vmem:[#allocation7 + $0x174] sm:$0xf]
    %v1508 = vld [vmem:[#allocation7 + $0x178] sm:$0xf]
    %v1509 = vld [vmem:[#allocation7 + $0x17c] sm:$0xf]
    %v1510 = vld [vmem:[#allocation7 + $0x180] sm:$0xf]
    %v1511 = vld [vmem:[#allocation7 + $0x184] sm:$0xf]
    %v1512 = vld [vmem:[#allocation7 + $0x188] sm:$0xf]
    %v1513 = vld [vmem:[#allocation7 + $0x18c] sm:$0xf]
    %v1514 = vld [vmem:[#allocation7 + $0x190] sm:$0xf]
    %v1515 = vld [vmem:[#allocation7 + $0x194] sm:$0xf]
    %v1516 = vld [vmem:[#allocation7 + $0x198] sm:$0xf]
    %v1517 = vld [vmem:[#allocation7 + $0x19c] sm:$0xf]
    %v1518 = vld [vmem:[#allocation7 + $0x1a0] sm:$0xf]
    %v1519 = vld [vmem:[#allocation7 + $0x1a4] sm:$0xf]
    %v1520 = vld [vmem:[#allocation7 + $0x1a8] sm:$0xf]
    %v1521 = vld [vmem:[#allocation7 + $0x1ac] sm:$0xf]
    %v1522 = vld [vmem:[#allocation7 + $0x1b0] sm:$0xf]
    %v1523 = vld [vmem:[#allocation7 + $0x1b4] sm:$0xf]
    %v1524 = vld [vmem:[#allocation7 + $0x1b8] sm:$0xf]
    %v1525 = vld [vmem:[#allocation7 + $0x1bc] sm:$0xf]
    %v1526 = vld [vmem:[#allocation7 + $0x1c0] sm:$0xf]
    %v1527 = vld [vmem:[#allocation7 + $0x1c4] sm:$0xf]
    %v1528 = vld [vmem:[#allocation7 + $0x1c8] sm:$0xf]
    %v1529 = vld [vmem:[#allocation7 + $0x1cc] sm:$0xf]
    %v1530 = vld [vmem:[#allocation7 + $0x1d0] sm:$0xf]
    %v1531 = vld [vmem:[#allocation7 + $0x1d4] sm:$0xf]
    %v1532 = vld [vmem:[#allocation7 + $0x1d8] sm:$0xf]
    %v1533 = vld [vmem:[#allocation7 + $0x1dc] sm:$0xf]
    %v1534 = vld [vmem:[#allocation7 + $0x1e0] sm:$0xf]
    %v1535 = vld [vmem:[#allocation7 + $0x1e4] sm:$0xf]
    %v1536 = vld [vmem:[#allocation7 + $0x1e8] sm:$0xf]
    %v1537 = vld [vmem:[#allocation7 + $0x1ec] sm:$0xf]
    %v1538 = vld [vmem:[#allocation7 + $0x1f0] sm:$0xf]
    %v1539 = vld [vmem:[#allocation7 + $0x1f4] sm:$0xf]
    %v1540 = vld [vmem:[#allocation7 + $0x1f8] sm:$0xf]
    %v1541 = vld [vmem:[#allocation7 + $0x1fc] sm:$0xf]
    %v1606 = vunpack.c.l.b16 %v1350
    %v1607 = vunpack.c.l.b16 %v1351
    %v1608 = vunpack.c.l.b16 %v1352
    %v1609 = vunpack.c.l.b16 %v1353
    %v1610 = vunpack.c.l.b16 %v1354
    %v1611 = vunpack.c.l.b16 %v1355
    %v1612 = vunpack.c.l.b16 %v1356
    %v1613 = vunpack.c.l.b16 %v1357
    %v1614 = vunpack.c.l.b16 %v1358
    %v1615 = vunpack.c.l.b16 %v1359
    %v1616 = vunpack.c.l.b16 %v1360
    %v1617 = vunpack.c.l.b16 %v1361
    %v1618 = vunpack.c.l.b16 %v1362
    %v1619 = vunpack.c.l.b16 %v1363
    %v1620 = vunpack.c.l.b16 %v1364
    %v1621 = vunpack.c.l.b16 %v1365
    %v1622 = vunpack.c.l.b16 %v1366
    %v1623 = vunpack.c.l.b16 %v1367
    %v1624 = vunpack.c.l.b16 %v1368
    %v1625 = vunpack.c.l.b16 %v1369
    %v1626 = vunpack.c.l.b16 %v1370
    %v1627 = vunpack.c.l.b16 %v1371
    %v1628 = vunpack.c.l.b16 %v1372
    %v1629 = vunpack.c.l.b16 %v1373
    %v1630 = vunpack.c.l.b16 %v1374
    %v1631 = vunpack.c.l.b16 %v1375
    %v1632 = vunpack.c.l.b16 %v1376
    %v1633 = vunpack.c.l.b16 %v1377
    %v1634 = vunpack.c.l.b16 %v1378
    %v1635 = vunpack.c.l.b16 %v1379
    %v1636 = vunpack.c.l.b16 %v1380
    %v1637 = vunpack.c.l.b16 %v1381
    %v1638 = vunpack.c.l.b16 %v1382
    %v1639 = vunpack.c.l.b16 %v1383
    %v1640 = vunpack.c.l.b16 %v1384
    %v1641 = vunpack.c.l.b16 %v1385
    %v1642 = vunpack.c.l.b16 %v1386
    %v1643 = vunpack.c.l.b16 %v1387
    %v1644 = vunpack.c.l.b16 %v1388
    %v1645 = vunpack.c.l.b16 %v1389
    %v1646 = vunpack.c.l.b16 %v1390
    %v1647 = vunpack.c.l.b16 %v1391
    %v1648 = vunpack.c.l.b16 %v1392
    %v1649 = vunpack.c.l.b16 %v1393
    %v1650 = vunpack.c.l.b16 %v1394
    %v1651 = vunpack.c.l.b16 %v1395
    %v1652 = vunpack.c.l.b16 %v1396
    %v1653 = vunpack.c.l.b16 %v1397
    %v1654 = vunpack.c.l.b16 %v1398
    %v1655 = vunpack.c.l.b16 %v1399
    %v1656 = vunpack.c.l.b16 %v1400
    %v1657 = vunpack.c.l.b16 %v1401
    %v1658 = vunpack.c.l.b16 %v1402
    %v1659 = vunpack.c.l.b16 %v1403
    %v1660 = vunpack.c.l.b16 %v1404
    %v1661 = vunpack.c.l.b16 %v1405
    %v1662 = vunpack.c.l.b16 %v1406
    %v1663 = vunpack.c.l.b16 %v1407
    %v1664 = vunpack.c.l.b16 %v1408
    %v1665 = vunpack.c.l.b16 %v1409
    %v1666 = vunpack.c.l.b16 %v1410
    %v1667 = vunpack.c.l.b16 %v1411
    %v1668 = vunpack.c.l.b16 %v1412
    %v1669 = vunpack.c.l.b16 %v1413
    %vm1670 = vcmask 1041409
    %v1671 = vsel %vm1670, %v1614, %v1606
    %vm1672 = vcmask 1042434
    %v1673 = vsel %vm1672, %v1622, %v1671
    %vm1674 = vcmask 1043459
    %v1675 = vsel %vm1674, %v1630, %v1673
    %vm1676 = vcmask 1044484
    %v1677 = vsel %vm1676, %v1638, %v1675
    %vm1678 = vcmask 1045509
    %v1679 = vsel %vm1678, %v1646, %v1677
    %vm1680 = vcmask 1046534
    %v1681 = vsel %vm1680, %v1654, %v1679
    %vm1682 = vcmask 1047559
    %v1683 = vsel %vm1682, %v1662, %v1681
    %v1684 = vsel %vm1670, %v1615, %v1607
    %v1685 = vsel %vm1672, %v1623, %v1684
    %v1686 = vsel %vm1674, %v1631, %v1685
    %v1687 = vsel %vm1676, %v1639, %v1686
    %v1688 = vsel %vm1678, %v1647, %v1687
    %v1689 = vsel %vm1680, %v1655, %v1688
    %v1690 = vsel %vm1682, %v1663, %v1689
    %v1691 = vsel %vm1670, %v1616, %v1608
    %v1692 = vsel %vm1672, %v1624, %v1691
    %v1693 = vsel %vm1674, %v1632, %v1692
    %v1694 = vsel %vm1676, %v1640, %v1693
    %v1695 = vsel %vm1678, %v1648, %v1694
    %v1696 = vsel %vm1680, %v1656, %v1695
    %v1697 = vsel %vm1682, %v1664, %v1696
    %v1698 = vsel %vm1670, %v1617, %v1609
    %v1699 = vsel %vm1672, %v1625, %v1698
    %v1700 = vsel %vm1674, %v1633, %v1699
    %v1701 = vsel %vm1676, %v1641, %v1700
    %v1702 = vsel %vm1678, %v1649, %v1701
    %v1703 = vsel %vm1680, %v1657, %v1702
    %v1704 = vsel %vm1682, %v1665, %v1703
    %v1705 = vsel %vm1670, %v1618, %v1610
    %v1706 = vsel %vm1672, %v1626, %v1705
    %v1707 = vsel %vm1674, %v1634, %v1706
    %v1708 = vsel %vm1676, %v1642, %v1707
    %v1709 = vsel %vm1678, %v1650, %v1708
    %v1710 = vsel %vm1680, %v1658, %v1709
    %v1711 = vsel %vm1682, %v1666, %v1710
    %v1712 = vsel %vm1670, %v1619, %v1611
    %v1713 = vsel %vm1672, %v1627, %v1712
    %v1714 = vsel %vm1674, %v1635, %v1713
    %v1715 = vsel %vm1676, %v1643, %v1714
    %v1716 = vsel %vm1678, %v1651, %v1715
    %v1717 = vsel %vm1680, %v1659, %v1716
    %v1718 = vsel %vm1682, %v1667, %v1717
    %v1719 = vsel %vm1670, %v1620, %v1612
    %v1720 = vsel %vm1672, %v1628, %v1719
    %v1721 = vsel %vm1674, %v1636, %v1720
    %v1722 = vsel %vm1676, %v1644, %v1721
    %v1723 = vsel %vm1678, %v1652, %v1722
    %v1724 = vsel %vm1680, %v1660, %v1723
    %v1725 = vsel %vm1682, %v1668, %v1724
    %v1726 = vsel %vm1670, %v1621, %v1613
    %v1727 = vsel %vm1672, %v1629, %v1726
    %v1728 = vsel %vm1674, %v1637, %v1727
    %v1729 = vsel %vm1676, %v1645, %v1728
    %v1730 = vsel %vm1678, %v1653, %v1729
    %v1731 = vsel %vm1680, %v1661, %v1730
    %v1732 = vsel %vm1682, %v1669, %v1731
    %v1733 = vpack.c.b16 %v1683, %v1683
    %v1734 = vpack.c.b16 %v1690, %v1690
    %v1735 = vpack.c.b16 %v1697, %v1697
    %v1736 = vpack.c.b16 %v1704, %v1704
    %v1737 = vpack.c.b16 %v1711, %v1711
    %v1738 = vpack.c.b16 %v1718, %v1718
    %v1739 = vpack.c.b16 %v1725, %v1725
    %v1740 = vpack.c.b16 %v1732, %v1732
    %v1877 = vunpack.c.l.b16 %v1414
    %v1878 = vunpack.c.l.b16 %v1415
    %v1879 = vunpack.c.l.b16 %v1416
    %v1880 = vunpack.c.l.b16 %v1417
    %v1881 = vunpack.c.l.b16 %v1418
    %v1882 = vunpack.c.l.b16 %v1419
    %v1883 = vunpack.c.l.b16 %v1420
    %v1884 = vunpack.c.l.b16 %v1421
    %v1885 = vunpack.c.l.b16 %v1422
    %v1886 = vunpack.c.l.b16 %v1423
    %v1887 = vunpack.c.l.b16 %v1424
    %v1888 = vunpack.c.l.b16 %v1425
    %v1889 = vunpack.c.l.b16 %v1426
    %v1890 = vunpack.c.l.b16 %v1427
    %v1891 = vunpack.c.l.b16 %v1428
    %v1892 = vunpack.c.l.b16 %v1429
    %v1893 = vunpack.c.l.b16 %v1430
    %v1894 = vunpack.c.l.b16 %v1431
    %v1895 = vunpack.c.l.b16 %v1432
    %v1896 = vunpack.c.l.b16 %v1433
    %v1897 = vunpack.c.l.b16 %v1434
    %v1898 = vunpack.c.l.b16 %v1435
    %v1899 = vunpack.c.l.b16 %v1436
    %v1900 = vunpack.c.l.b16 %v1437
    %v1901 = vunpack.c.l.b16 %v1438
    %v1902 = vunpack.c.l.b16 %v1439
    %v1903 = vunpack.c.l.b16 %v1440
    %v1904 = vunpack.c.l.b16 %v1441
    %v1905 = vunpack.c.l.b16 %v1442
    %v1906 = vunpack.c.l.b16 %v1443
    %v1907 = vunpack.c.l.b16 %v1444
    %v1908 = vunpack.c.l.b16 %v1445
    %v1909 = vunpack.c.l.b16 %v1446
    %v1910 = vunpack.c.l.b16 %v1447
    %v1911 = vunpack.c.l.b16 %v1448
    %v1912 = vunpack.c.l.b16 %v1449
    %v1913 = vunpack.c.l.b16 %v1450
    %v1914 = vunpack.c.l.b16 %v1451
    %v1915 = vunpack.c.l.b16 %v1452
    %v1916 = vunpack.c.l.b16 %v1453
    %v1917 = vunpack.c.l.b16 %v1454
    %v1918 = vunpack.c.l.b16 %v1455
    %v1919 = vunpack.c.l.b16 %v1456
    %v1920 = vunpack.c.l.b16 %v1457
    %v1921 = vunpack.c.l.b16 %v1458
    %v1922 = vunpack.c.l.b16 %v1459
    %v1923 = vunpack.c.l.b16 %v1460
    %v1924 = vunpack.c.l.b16 %v1461
    %v1925 = vunpack.c.l.b16 %v1462
    %v1926 = vunpack.c.l.b16 %v1463
    %v1927 = vunpack.c.l.b16 %v1464
    %v1928 = vunpack.c.l.b16 %v1465
    %v1929 = vunpack.c.l.b16 %v1466
    %v1930 = vunpack.c.l.b16 %v1467
    %v1931 = vunpack.c.l.b16 %v1468
    %v1932 = vunpack.c.l.b16 %v1469
    %v1933 = vunpack.c.l.b16 %v1470
    %v1934 = vunpack.c.l.b16 %v1471
    %v1935 = vunpack.c.l.b16 %v1472
    %v1936 = vunpack.c.l.b16 %v1473
    %v1937 = vunpack.c.l.b16 %v1474
    %v1938 = vunpack.c.l.b16 %v1475
    %v1939 = vunpack.c.l.b16 %v1476
    %v1940 = vunpack.c.l.b16 %v1477
    %v1941 = vunpack.c.l.b16 %v1478
    %v1942 = vunpack.c.l.b16 %v1479
    %v1943 = vunpack.c.l.b16 %v1480
    %v1944 = vunpack.c.l.b16 %v1481
    %v1945 = vunpack.c.l.b16 %v1482
    %v1946 = vunpack.c.l.b16 %v1483
    %v1947 = vunpack.c.l.b16 %v1484
    %v1948 = vunpack.c.l.b16 %v1485
    %v1949 = vunpack.c.l.b16 %v1486
    %v1950 = vunpack.c.l.b16 %v1487
    %v1951 = vunpack.c.l.b16 %v1488
    %v1952 = vunpack.c.l.b16 %v1489
    %v1953 = vunpack.c.l.b16 %v1490
    %v1954 = vunpack.c.l.b16 %v1491
    %v1955 = vunpack.c.l.b16 %v1492
    %v1956 = vunpack.c.l.b16 %v1493
    %v1957 = vunpack.c.l.b16 %v1494
    %v1958 = vunpack.c.l.b16 %v1495
    %v1959 = vunpack.c.l.b16 %v1496
    %v1960 = vunpack.c.l.b16 %v1497
    %v1961 = vunpack.c.l.b16 %v1498
    %v1962 = vunpack.c.l.b16 %v1499
    %v1963 = vunpack.c.l.b16 %v1500
    %v1964 = vunpack.c.l.b16 %v1501
    %v1965 = vunpack.c.l.b16 %v1502
    %v1966 = vunpack.c.l.b16 %v1503
    %v1967 = vunpack.c.l.b16 %v1504
    %v1968 = vunpack.c.l.b16 %v1505
    %v1969 = vunpack.c.l.b16 %v1506
    %v1970 = vunpack.c.l.b16 %v1507
    %v1971 = vunpack.c.l.b16 %v1508
    %v1972 = vunpack.c.l.b16 %v1509
    %v1973 = vunpack.c.l.b16 %v1510
    %v1974 = vunpack.c.l.b16 %v1511
    %v1975 = vunpack.c.l.b16 %v1512
    %v1976 = vunpack.c.l.b16 %v1513
    %v1977 = vunpack.c.l.b16 %v1514
    %v1978 = vunpack.c.l.b16 %v1515
    %v1979 = vunpack.c.l.b16 %v1516
    %v1980 = vunpack.c.l.b16 %v1517
    %v1981 = vunpack.c.l.b16 %v1518
    %v1982 = vunpack.c.l.b16 %v1519
    %v1983 = vunpack.c.l.b16 %v1520
    %v1984 = vunpack.c.l.b16 %v1521
    %v1985 = vunpack.c.l.b16 %v1522
    %v1986 = vunpack.c.l.b16 %v1523
    %v1987 = vunpack.c.l.b16 %v1524
    %v1988 = vunpack.c.l.b16 %v1525
    %v1989 = vunpack.c.l.b16 %v1526
    %v1990 = vunpack.c.l.b16 %v1527
    %v1991 = vunpack.c.l.b16 %v1528
    %v1992 = vunpack.c.l.b16 %v1529
    %v1993 = vunpack.c.l.b16 %v1530
    %v1994 = vunpack.c.l.b16 %v1531
    %v1995 = vunpack.c.l.b16 %v1532
    %v1996 = vunpack.c.l.b16 %v1533
    %v1997 = vunpack.c.l.b16 %v1534
    %v1998 = vunpack.c.l.b16 %v1535
    %v1999 = vunpack.c.l.b16 %v1536
    %v2000 = vunpack.c.l.b16 %v1537
    %v2001 = vunpack.c.l.b16 %v1538
    %v2002 = vunpack.c.l.b16 %v1539
    %v2003 = vunpack.c.l.b16 %v1540
    %v2004 = vunpack.c.l.b16 %v1541
    %v2005 = vpack.c.b16 %v1878, %v1877
    %v2006 = vpack.c.b16 %v1880, %v1879
    %v2007 = vpack.c.b16 %v1882, %v1881
    %v2008 = vpack.c.b16 %v1884, %v1883
    %v2009 = vpack.c.b16 %v1886, %v1885
    %v2010 = vpack.c.b16 %v1888, %v1887
    %v2011 = vpack.c.b16 %v1890, %v1889
    %v2012 = vpack.c.b16 %v1892, %v1891
    %v2013 = vpack.c.b16 %v1894, %v1893
    %v2014 = vpack.c.b16 %v1896, %v1895
    %v2015 = vpack.c.b16 %v1898, %v1897
    %v2016 = vpack.c.b16 %v1900, %v1899
    %v2017 = vpack.c.b16 %v1902, %v1901
    %v2018 = vpack.c.b16 %v1904, %v1903
    %v2019 = vpack.c.b16 %v1906, %v1905
    %v2020 = vpack.c.b16 %v1908, %v1907
    %v2021 = vpack.c.b16 %v1910, %v1909
    %v2022 = vpack.c.b16 %v1912, %v1911
    %v2023 = vpack.c.b16 %v1914, %v1913
    %v2024 = vpack.c.b16 %v1916, %v1915
    %v2025 = vpack.c.b16 %v1918, %v1917
    %v2026 = vpack.c.b16 %v1920, %v1919
    %v2027 = vpack.c.b16 %v1922, %v1921
    %v2028 = vpack.c.b16 %v1924, %v1923
    %v2029 = vpack.c.b16 %v1926, %v1925
    %v2030 = vpack.c.b16 %v1928, %v1927
    %v2031 = vpack.c.b16 %v1930, %v1929
    %v2032 = vpack.c.b16 %v1932, %v1931
    %v2033 = vpack.c.b16 %v1934, %v1933
    %v2034 = vpack.c.b16 %v1936, %v1935
    %v2035 = vpack.c.b16 %v1938, %v1937
    %v2036 = vpack.c.b16 %v1940, %v1939
    %v2037 = vpack.c.b16 %v1942, %v1941
    %v2038 = vpack.c.b16 %v1944, %v1943
    %v2039 = vpack.c.b16 %v1946, %v1945
    %v2040 = vpack.c.b16 %v1948, %v1947
    %v2041 = vpack.c.b16 %v1950, %v1949
    %v2042 = vpack.c.b16 %v1952, %v1951
    %v2043 = vpack.c.b16 %v1954, %v1953
    %v2044 = vpack.c.b16 %v1956, %v1955
    %v2045 = vpack.c.b16 %v1958, %v1957
    %v2046 = vpack.c.b16 %v1960, %v1959
    %v2047 = vpack.c.b16 %v1962, %v1961
    %v2048 = vpack.c.b16 %v1964, %v1963
    %v2049 = vpack.c.b16 %v1966, %v1965
    %v2050 = vpack.c.b16 %v1968, %v1967
    %v2051 = vpack.c.b16 %v1970, %v1969
    %v2052 = vpack.c.b16 %v1972, %v1971
    %v2053 = vpack.c.b16 %v1974, %v1973
    %v2054 = vpack.c.b16 %v1976, %v1975
    %v2055 = vpack.c.b16 %v1978, %v1977
    %v2056 = vpack.c.b16 %v1980, %v1979
    %v2057 = vpack.c.b16 %v1982, %v1981
    %v2058 = vpack.c.b16 %v1984, %v1983
    %v2059 = vpack.c.b16 %v1986, %v1985
    %v2060 = vpack.c.b16 %v1988, %v1987
    %v2061 = vpack.c.b16 %v1990, %v1989
    %v2062 = vpack.c.b16 %v1992, %v1991
    %v2063 = vpack.c.b16 %v1994, %v1993
    %v2064 = vpack.c.b16 %v1996, %v1995
    %v2065 = vpack.c.b16 %v1998, %v1997
    %v2066 = vpack.c.b16 %v2000, %v1999
    %v2067 = vpack.c.b16 %v2002, %v2001
    %v2068 = vpack.c.b16 %v2004, %v2003
    %2133 = vmatpush.bf16.msra.mxu0 %v2012
    %2134 = vmatpush.bf16.msra.mxu0 %v2011
    %2135 = vmatpush.bf16.msra.mxu0 %v2010
    %2136 = vmatpush.bf16.msra.mxu0 %v2009
    %2137 = vmatpush.bf16.msra.mxu0 %v2008
    %2138 = vmatpush.bf16.msra.mxu0 %v2007
    %2139 = vmatpush.bf16.msra.mxu0 %v2006
    %2140 = vmatpush.bf16.msra.mxu0 %v2005
    %2141 = vmatmul.bf16.gmra.mxu0 %v1733
    %v2142 = vpop.f32.mrf.mxu0
    %v2143 = vadd.f32 0.0, %v2142
    %v2144 = vpop.f32.mrf.mxu0
    %2145 = vdwg.mxu0
    %2146 = vmatpush.bf16.msra.mxu0 %v2020
    %2147 = vmatpush.bf16.msra.mxu0 %v2019
    %2148 = vmatpush.bf16.msra.mxu0 %v2018
    %2149 = vmatpush.bf16.msra.mxu0 %v2017
    %2150 = vmatpush.bf16.msra.mxu0 %v2016
    %2151 = vmatpush.bf16.msra.mxu0 %v2015
    %2152 = vmatpush.bf16.msra.mxu0 %v2014
    %2153 = vmatpush.bf16.msra.mxu0 %v2013
    %2154 = vmatmul.bf16.gmra.mxu0 %v1734
    %v2155 = vpop.f32.mrf.mxu0
    %v2156 = vadd.f32 %v2143, %v2155
    %v2157 = vpop.f32.mrf.mxu0
    %2158 = vdwg.mxu0
    %2159 = vmatpush.bf16.msra.mxu0 %v2028
    %2160 = vmatpush.bf16.msra.mxu0 %v2027
    %2161 = vmatpush.bf16.msra.mxu0 %v2026
    %2162 = vmatpush.bf16.msra.mxu0 %v2025
    %2163 = vmatpush.bf16.msra.mxu0 %v2024
    %2164 = vmatpush.bf16.msra.mxu0 %v2023
    %2165 = vmatpush.bf16.msra.mxu0 %v2022
    %2166 = vmatpush.bf16.msra.mxu0 %v2021
    %2167 = vmatmul.bf16.gmra.mxu0 %v1735
    %v2168 = vpop.f32.mrf.mxu0
    %v2169 = vadd.f32 %v2156, %v2168
    %v2170 = vpop.f32.mrf.mxu0
    %2171 = vdwg.mxu0
    %2172 = vmatpush.bf16.msra.mxu0 %v2036
    %2173 = vmatpush.bf16.msra.mxu0 %v2035
    %2174 = vmatpush.bf16.msra.mxu0 %v2034
    %2175 = vmatpush.bf16.msra.mxu0 %v2033
    %2176 = vmatpush.bf16.msra.mxu0 %v2032
    %2177 = vmatpush.bf16.msra.mxu0 %v2031
    %2178 = vmatpush.bf16.msra.mxu0 %v2030
    %2179 = vmatpush.bf16.msra.mxu0 %v2029
    %2180 = vmatmul.bf16.gmra.mxu0 %v1736
    %v2181 = vpop.f32.mrf.mxu0
    %v2182 = vadd.f32 %v2169, %v2181
    %v2183 = vpop.f32.mrf.mxu0
    %2184 = vdwg.mxu0
    %2185 = vmatpush.bf16.msra.mxu0 %v2044
    %2186 = vmatpush.bf16.msra.mxu0 %v2043
    %2187 = vmatpush.bf16.msra.mxu0 %v2042
    %2188 = vmatpush.bf16.msra.mxu0 %v2041
    %2189 = vmatpush.bf16.msra.mxu0 %v2040
    %2190 = vmatpush.bf16.msra.mxu0 %v2039
    %2191 = vmatpush.bf16.msra.mxu0 %v2038
    %2192 = vmatpush.bf16.msra.mxu0 %v2037
    %2193 = vmatmul.bf16.gmra.mxu0 %v1737
    %v2194 = vpop.f32.mrf.mxu0
    %v2195 = vadd.f32 %v2182, %v2194
    %v2196 = vpop.f32.mrf.mxu0
    %2197 = vdwg.mxu0
    %2198 = vmatpush.bf16.msra.mxu0 %v2052
    %2199 = vmatpush.bf16.msra.mxu0 %v2051
    %2200 = vmatpush.bf16.msra.mxu0 %v2050
    %2201 = vmatpush.bf16.msra.mxu0 %v2049
    %2202 = vmatpush.bf16.msra.mxu0 %v2048
    %2203 = vmatpush.bf16.msra.mxu0 %v2047
    %2204 = vmatpush.bf16.msra.mxu0 %v2046
    %2205 = vmatpush.bf16.msra.mxu0 %v2045
    %2206 = vmatmul.bf16.gmra.mxu0 %v1738
    %v2207 = vpop.f32.mrf.mxu0
    %v2208 = vadd.f32 %v2195, %v2207
    %v2209 = vpop.f32.mrf.mxu0
    %2210 = vdwg.mxu0
    %2211 = vmatpush.bf16.msra.mxu0 %v2060
    %2212 = vmatpush.bf16.msra.mxu0 %v2059
    %2213 = vmatpush.bf16.msra.mxu0 %v2058
    %2214 = vmatpush.bf16.msra.mxu0 %v2057
    %2215 = vmatpush.bf16.msra.mxu0 %v2056
    %2216 = vmatpush.bf16.msra.mxu0 %v2055
    %2217 = vmatpush.bf16.msra.mxu0 %v2054
    %2218 = vmatpush.bf16.msra.mxu0 %v2053
    %2219 = vmatmul.bf16.gmra.mxu0 %v1739
    %v2220 = vpop.f32.mrf.mxu0
    %v2221 = vadd.f32 %v2208, %v2220
    %v2222 = vpop.f32.mrf.mxu0
    %2223 = vdwg.mxu0
    %2224 = vmatpush.bf16.msra.mxu0 %v2068
    %2225 = vmatpush.bf16.msra.mxu0 %v2067
    %2226 = vmatpush.bf16.msra.mxu0 %v2066
    %2227 = vmatpush.bf16.msra.mxu0 %v2065
    %2228 = vmatpush.bf16.msra.mxu0 %v2064
    %2229 = vmatpush.bf16.msra.mxu0 %v2063
    %2230 = vmatpush.bf16.msra.mxu0 %v2062
    %2231 = vmatpush.bf16.msra.mxu0 %v2061
    %2232 = vmatmul.bf16.gmra.mxu0 %v1740
    %v2233 = vpop.f32.mrf.mxu0
    %v2234 = vadd.f32 %v2221, %v2233
    %v2235 = vpop.f32.mrf.mxu0
    %2236 = vdwg.mxu0
    %2237 = vst [vmem:[#allocation8] sm:$0xff] %v2234
    // Predicated region
    $region26: #{tpu_custom_call.1} parent=1 // pred_check
      _
    $region27: #{tpu_custom_call.1} parent=1 // pred_check_branch
      %2239 = sbr.rel (0) target = $region29
    $region28: #{tpu_custom_call.1} parent=1 // pred_region
      %2241 = vsyncadd [#allocation4], 0
      %s2243 = sshll.u32 [#allocation8], 4
      %s2244 = int_to_ptr.vmem [resolvable:$true] %s2243
      %s2245 = sshll.u32 %s3, 4
      %s2246 = int_to_ptr.hbm [resolvable:$true] %s2245
      %2248 = dma.vmem_to_hbm [thread:$0]  %s2244, 128, %s2246, [#allocation4]
    $region29: #{tpu_custom_call.1} parent=1 // pred_fallthru
      _
    // Predicated region
    $region30: #{tpu_custom_call.1} parent=1 // pred_check
      _
    $region31: #{tpu_custom_call.1} parent=1 // pred_check_branch
      %2250 = sbr.rel (0) target = $region33
    $region32: #{tpu_custom_call.1} parent=1 // pred_region
      %2252 = dma.done [#allocation4], 128
    $region33: #{tpu_custom_call.1} parent=1 // pred_fallthru
      _
    %2253 = vsyncpa [#allocation3], 1
    %2254 = vsyncpa [#allocation6], 1
    %2255 = vsyncpa [#allocation4], 1

</llo_original>
